<compile_context>
chip_gen: v7x
topology: tpu7x:2x2x1
jax: 0.10.0
libtpu: 0.0.40
codegen_flags: <defaults>
</compile_context>

<pallas_src>
from functools import partial

import jax
import jax.numpy as jnp
from jax import lax
from jax.experimental import pallas as pl
from jax.experimental.pallas import tpu as pltpu

_SQRT_HALF = 0.7071067811865476  # 1/sqrt(2)

# "NT" matmul: contract last dim of LHS against last dim of RHS (x @ W^T).
_NT_DIMS = (((1,), (1,)), ((), ()))

_VMEM_BUDGET = 24 * 1024 * 1024  # target footprint incl. double buffering


def _erf_approx(x):
    """Abramowitz & Stegun 7.1.26 erf approximation (max abs error ~1.5e-7)."""
    a1, a2, a3, a4, a5 = (0.254829592, -0.284496736, 1.421413741,
                          -1.453152027, 1.061405429)
    p = 0.3275911
    ax = jnp.abs(x)
    t = 1.0 / (1.0 + p * ax)
    poly = t * (a1 + t * (a2 + t * (a3 + t * (a4 + t * a5))))
    y = 1.0 - poly * jnp.exp(-ax * ax)
    return jnp.where(x < 0.0, -y, y)


def _gelu_exact(x):
    """Exact (erf-based) GELU, matching PyTorch nn.GELU() default."""
    return 0.5 * x * (1.0 + _erf_approx(x * _SQRT_HALF))


def _bert_intermediate_kernel(x_ref, w_ref, b_ref, o_ref, *, compute_dtype):
    # x_ref: (tm, Hp)  w_ref: (tn, Hp)  b_ref: (1, tn)  o_ref: (tm, tn)
    x = x_ref[...]
    w = w_ref[...]
    if compute_dtype is not None:
        x = x.astype(compute_dtype)
        w = w.astype(compute_dtype)
    # Full-K matmul in one shot: no k-grid, no accumulator round-trip.
    z = lax.dot_general(x, w, dimension_numbers=_NT_DIMS,
                        preferred_element_type=jnp.float32)
    z = z + b_ref[...].astype(jnp.float32)     # fused bias add
    o_ref[...] = _gelu_exact(z).astype(o_ref.dtype)


def _round_up(x, m):
    return ((x + m - 1) // m) * m


def _pick_tile(cap, total, step):
    """Largest multiple of `step` <= cap dividing `total` (itself a multiple
    of `step`); falls back to `cap` (padding) if only much smaller divisors
    exist."""
    cap = max(step, (min(cap, total) // step) * step)
    lo = max(step, cap // 2)
    for cand in range(cap, lo - 1, -step):
        if total % cand == 0:
            return cand
    return cap


def bert_intermediate(hidden_states, weight, bias, *, tm=512,
                      compute_dtype=None):
    """hidden_states: (..., H); weight: (I, H); bias: (I,) -> (..., I)."""
    orig_shape = hidden_states.shape
    H = orig_shape[-1]
    I = weight.shape[0]

    x2 = hidden_states.reshape(-1, H)           # (M, H)
    M = x2.shape[0]
    itemsize = 4                                 # budget conservatively in f32

    # ---- tile selection -----------------------------------------------------
    Hp = _round_up(H, 128)                       # contraction dim, fully in-VMEM
    # Row tile: multiple of 8, capped so the double-buffered x block stays
    # well under the budget even for very large H.
    max_tm = max(8, ((_VMEM_BUDGET // 3) // (2 * Hp * itemsize) // 8) * 8)
    tm = _pick_tile(min(tm, max_tm), _round_up(M, 8), 8)
    Mp = _round_up(M, tm)

    # Column tile: as large as the remaining budget allows (weight-resident).
    Ip128 = _round_up(I, 128)
    x_bytes = 2 * tm * Hp * itemsize
    per_tn = itemsize * (2 * Hp + 2 * tm + 2)    # W + out + bias, double-buffered
    tn_cap = max(128, ((_VMEM_BUDGET - x_bytes) // per_tn // 128) * 128)
    tn = _pick_tile(tn_cap, Ip128, 128)
    Ip = _round_up(Ip128, tn)

    # ---- padding (exact: zero K-columns / extra rows & cols sliced off) -----
    if Mp != M or Hp != H:
        x2 = jnp.pad(x2, ((0, Mp - M), (0, Hp - H)))
    w2 = weight
    if Ip != I or Hp != H:
        w2 = jnp.pad(w2, ((0, Ip - I), (0, Hp - H)))
    b2 = bias.reshape(1, I)
    if Ip != I:
        b2 = jnp.pad(b2, ((0, 0), (0, Ip - I)))

    grid = (Ip // tn, Mp // tm)                  # j outer (W tile), i inner (rows)

    est_vmem = itemsize * (2 * tm * Hp + 2 * tn * Hp + 2 * tm * tn + 2 * tn)
    vmem_limit = int(min(max(est_vmem * 5 // 4 + (2 << 20), 32 << 20), 100 << 20))

    kernel = partial(_bert_intermediate_kernel, compute_dtype=compute_dtype)

    out = pl.pallas_call(
        kernel,
        out_shape=jax.ShapeDtypeStruct((Mp, Ip), hidden_states.dtype),
        grid_spec=pltpu.PrefetchScalarGridSpec(
            num_scalar_prefetch=0,
            grid=grid,
            in_specs=[
                # activations stream over the inner (i) axis
                pl.BlockSpec((tm, Hp), lambda j, i: (i, 0)),
                # weight tile constant along i -> DMA'd once per j (resident)
                pl.BlockSpec((tn, Hp), lambda j, i: (j, 0)),
                # bias tile, constant along i
                pl.BlockSpec((1, tn), lambda j, i: (0, j)),
            ],
            out_specs=pl.BlockSpec((tm, tn), lambda j, i: (i, j)),
        ),
        compiler_params=pltpu.CompilerParams(
            dimension_semantics=("parallel", "parallel"),
            vmem_limit_bytes=vmem_limit),
    )(x2, w2, b2)

    out = out[:M, :I]
    return out.reshape(*orig_shape[:-1], I)


def _reference(hidden_states, weight, bias):
    z = jnp.dot(hidden_states, weight.T,
                preferred_element_type=jnp.float32) + bias
    return jax.nn.gelu(z, approximate=False)


if __name__ == "__main__":
    # Small BERT-like config: hidden_size=128, intermediate_size=512 (=4*H),
    # batch=2, seq=64, hidden_act='gelu'.
    B, S, H, I = 2, 64, 128, 512

    key = jax.random.PRNGKey(0)
    k_x, k_w, k_b = jax.random.split(key, 3)

    hidden_states = jax.random.normal(k_x, (B, S, H), dtype=jnp.float32)
    weight = 0.02 * jax.random.normal(k_w, (I, H), dtype=jnp.float32)
    bias = 0.02 * jax.random.normal(k_b, (I,), dtype=jnp.float32)

    out = bert_intermediate(hidden_states, weight, bias)
    out = jax.block_until_ready(out)
    ref = _reference(hidden_states, weight, bias)
    assert out.shape == (B, S, I)
    assert jnp.allclose(out, ref, atol=2e-5, rtol=2e-5), "f32 mismatch vs ref"

    # Ragged (non-tile-multiple) shapes exercise the padding path.
    B2, S2, H2, I2 = 1, 13, 96, 200
    hs2 = jax.random.normal(k_x, (B2, S2, H2), dtype=jnp.float32)
    w2 = 0.02 * jax.random.normal(k_w, (I2, H2), dtype=jnp.float32)
    b2 = 0.02 * jax.random.normal(k_b, (I2,), dtype=jnp.float32)
    out2 = jax.block_until_ready(bert_intermediate(hs2, w2, b2))
    assert out2.shape == (B2, S2, I2)
    assert jnp.allclose(out2, _reference(hs2, w2, b2), atol=2e-5, rtol=2e-5), \
        "ragged f32 mismatch vs ref"

    # bf16-MXU compute path (operands cast in-kernel, f32 accumulation).
    out_bf = jax.block_until_ready(
        bert_intermediate(hidden_states, weight, bias,
                          compute_dtype=jnp.bfloat16))
    assert jnp.allclose(out_bf, ref, atol=2e-2, rtol=2e-2), "bf16 mismatch vs ref"

    print("KERNEL_OK")
</pallas_src>

<mosaic_0001>
module attributes {stable_mosaic.version = 11 : i64} {
  func.func @_bert_intermediate_kernel(%arg0: i32, %arg1: i32, %arg2: memref<128x128xf32, #tpu.memory_space<vmem>>, %arg3: memref<512x128xf32, #tpu.memory_space<vmem>>, %arg4: memref<1x512xf32, #tpu.memory_space<vmem>>, %arg5: memref<128x512xf32, #tpu.memory_space<vmem>>) attributes {dimension_semantics = [#tpu.dimension_semantics<parallel>, #tpu.dimension_semantics<parallel>], iteration_bounds = array<i64: 1, 1>, scalar_prefetch = 0 : i64, scratch_operands = 0 : i64, tpu.core_type = #tpu.core_type<tc>, window_params = [{transform_indices = @transform_0, window_bounds = array<i64: 128, 128>}, {transform_indices = @transform_1, window_bounds = array<i64: 512, 128>}, {transform_indices = @transform_2, window_bounds = array<i64: 1, 512>}, {transform_indices = @transform_3, window_bounds = array<i64: 128, 512>}]} {
    %c0 = arith.constant 0 : index
    %c0_0 = arith.constant 0 : index
    %0 = vector.load %arg2[%c0, %c0_0] : memref<128x128xf32, #tpu.memory_space<vmem>>, vector<128x128xf32>
    %c0_1 = arith.constant 0 : index
    %c0_2 = arith.constant 0 : index
    %1 = vector.load %arg3[%c0_1, %c0_2] : memref<512x128xf32, #tpu.memory_space<vmem>>, vector<512x128xf32>
    %cst = arith.constant dense<0.000000e+00> : vector<128x512xf32>
    %2 = tpu.matmul %0, %1, %cst {dimension_numbers = #tpu.dot_dimension_numbers<[1], [1], [0], [0], [0, 0, 1, 0], [], []>} : vector<128x128xf32>, vector<512x128xf32>, vector<128x512xf32> -> vector<128x512xf32>
    %c0_3 = arith.constant 0 : index
    %c0_4 = arith.constant 0 : index
    %3 = vector.load %arg4[%c0_3, %c0_4] : memref<1x512xf32, #tpu.memory_space<vmem>>, vector<1x512xf32>
    %4 = vector.broadcast %3 : vector<1x512xf32> to vector<128x512xf32>
    %5 = arith.addf %2, %4 : vector<128x512xf32>
    %cst_5 = arith.constant 5.000000e-01 : f32
    %6 = vector.broadcast %cst_5 : f32 to vector<128x512xf32>
    %7 = arith.mulf %6, %5 : vector<128x512xf32>
    %cst_6 = arith.constant 0.707106769 : f32
    %8 = vector.broadcast %cst_6 : f32 to vector<128x512xf32>
    %9 = arith.mulf %5, %8 : vector<128x512xf32>
    %10 = math.absf %9 : vector<128x512xf32>
    %cst_7 = arith.constant 0.327591091 : f32
    %11 = vector.broadcast %cst_7 : f32 to vector<128x512xf32>
    %12 = arith.mulf %11, %10 : vector<128x512xf32>
    %cst_8 = arith.constant 1.000000e+00 : f32
    %13 = vector.broadcast %cst_8 : f32 to vector<128x512xf32>
    %14 = arith.addf %13, %12 : vector<128x512xf32>
    %cst_9 = arith.constant 1.000000e+00 : f32
    %15 = vector.broadcast %cst_9 : f32 to vector<128x512xf32>
    %16 = arith.divf %15, %14 : vector<128x512xf32>
    %cst_10 = arith.constant 1.06140542 : f32
    %17 = vector.broadcast %cst_10 : f32 to vector<128x512xf32>
    %18 = arith.mulf %16, %17 : vector<128x512xf32>
    %cst_11 = arith.constant -1.45315206 : f32
    %19 = vector.broadcast %cst_11 : f32 to vector<128x512xf32>
    %20 = arith.addf %19, %18 : vector<128x512xf32>
    %21 = arith.mulf %16, %20 : vector<128x512xf32>
    %cst_12 = arith.constant 1.42141378 : f32
    %22 = vector.broadcast %cst_12 : f32 to vector<128x512xf32>
    %23 = arith.addf %22, %21 : vector<128x512xf32>
    %24 = arith.mulf %16, %23 : vector<128x512xf32>
    %cst_13 = arith.constant -0.284496725 : f32
    %25 = vector.broadcast %cst_13 : f32 to vector<128x512xf32>
    %26 = arith.addf %25, %24 : vector<128x512xf32>
    %27 = arith.mulf %16, %26 : vector<128x512xf32>
    %cst_14 = arith.constant 0.254829586 : f32
    %28 = vector.broadcast %cst_14 : f32 to vector<128x512xf32>
    %29 = arith.addf %28, %27 : vector<128x512xf32>
    %30 = arith.mulf %16, %29 : vector<128x512xf32>
    %cst_15 = arith.constant 0.000000e+00 : f32
    %31 = vector.broadcast %cst_15 : f32 to vector<128x512xf32>
    %32 = arith.subf %31, %10 : vector<128x512xf32>
    %33 = arith.mulf %32, %10 : vector<128x512xf32>
    %34 = math.exp %33 : vector<128x512xf32>
    %35 = arith.mulf %30, %34 : vector<128x512xf32>
    %cst_16 = arith.constant 1.000000e+00 : f32
    %36 = vector.broadcast %cst_16 : f32 to vector<128x512xf32>
    %37 = arith.subf %36, %35 : vector<128x512xf32>
    %cst_17 = arith.constant 0.000000e+00 : f32
    %38 = vector.broadcast %cst_17 : f32 to vector<128x512xf32>
    %39 = arith.cmpf olt, %9, %38 : vector<128x512xf32>
    %cst_18 = arith.constant 0.000000e+00 : f32
    %40 = vector.broadcast %cst_18 : f32 to vector<128x512xf32>
    %41 = arith.subf %40, %37 : vector<128x512xf32>
    %42 = arith.select %39, %41, %37 : vector<128x512xi1>, vector<128x512xf32>
    %cst_19 = arith.constant 1.000000e+00 : f32
    %43 = vector.broadcast %cst_19 : f32 to vector<128x512xf32>
    %44 = arith.addf %43, %42 : vector<128x512xf32>
    %45 = arith.mulf %7, %44 : vector<128x512xf32>
    %c0_20 = arith.constant 0 : index
    %c0_21 = arith.constant 0 : index
    %46 = vector.load %arg5[%c0_20, %c0_21] : memref<128x512xf32, #tpu.memory_space<vmem>>, vector<128x512xf32>
    tpu.vector_store %arg5[%c0_20, %c0_21], %45 {strides = array<i32>} : memref<128x512xf32, #tpu.memory_space<vmem>>, vector<128x512xf32>,
    return
  }
  func.func @transform_0(%arg0: i32, %arg1: i32) -> (i32, i32) {
    %c0_i32 = arith.constant 0 : i32
    %c0_i32_0 = arith.constant 0 : i32
    return %arg1, %c0_i32 : i32, i32
  }
  func.func @transform_1(%arg0: i32, %arg1: i32) -> (i32, i32) {
    %c0_i32 = arith.constant 0 : i32
    %c0_i32_0 = arith.constant 0 : i32
    return %arg0, %c0_i32 : i32, i32
  }
  func.func @transform_2(%arg0: i32, %arg1: i32) -> (i32, i32) {
    %c0_i32 = arith.constant 0 : i32
    %c0_i32_0 = arith.constant 0 : i32
    return %c0_i32, %arg0 : i32, i32
  }
  func.func @transform_3(%arg0: i32, %arg1: i32) -> (i32, i32) {
    %c0_i32 = arith.constant 0 : i32
    return %arg1, %arg0 : i32, i32
  }
}

</mosaic_0001>

<llo_original>
// kernel: tpu_custom_call.1
$region0: #{tpu_custom_call.1}
  #allocation0 [shape = 'u32[]', space=smem, size = 0x4, offset = 0x4, fixed_abs, tag = 'smem constant byte address 0x4 - core index']
  #allocation1 [shape = 'u32[144,128]{1,0:T(1,128)}', space=vmem, size = 0x12000, scoped, tag = 'internal scratch']
  %s0 = inlined_call_operand.hbm [shape: f32[128,128], index: 0, kind: input, shape index: {}]
  %s1 = inlined_call_operand.hbm [shape: f32[512,128], index: 1, kind: input, shape index: {}]
  %s2 = inlined_call_operand.vmem [shape: f32[1,512], index: 2, kind: input, shape index: {}]
  %s3 = inlined_call_operand.hbm [shape: f32[128,512], index: 3, kind: output, shape index: {}]
  %s4 = sld [smem:[#allocation0]]
  $region30: #{tpu_custom_call.1} parent=0
    _
  %s6 = ssub.s32 1, %s4
  %s7 = scalar_select 0, %s6, %s4
  $region1: #{tpu_custom_call.1} parent=0
    #allocation2 [shape = 'u8[65536]{0}', space=vmem, size = 0x10000, scoped, tag = 'input window, operand 0, single buffered']
    #allocation3 [shape = 's32[1]{0}', space=sflag, size = 0x4, scoped, tag = 'scoped memory for tpu_custom_call.1']
    #allocation4 [shape = 's32[1]{0}', space=sflag, size = 0x4, scoped, tag = 'scoped memory for tpu_custom_call.1']
    #allocation5 [shape = 'u8[262144]{0}', space=vmem, size = 0x40000, scoped, tag = 'input window, operand 1, single buffered']
    #allocation6 [shape = 's32[1]{0}', space=sflag, size = 0x4, scoped, tag = 'scoped memory for tpu_custom_call.1']
    #allocation7 [shape = 'u8[262144]{0}', space=vmem, size = 0x40000, scoped, tag = 'output window, operand 0, single buffered']
    %8 = vsyncpa [#allocation3], 0
    %9 = vsyncpa [#allocation6], 0
    %10 = vsyncpa [#allocation4], 0
    // Predicated region
    $region2: #{tpu_custom_call.1} parent=1 // pred_check
      _
    $region3: #{tpu_custom_call.1} parent=1 // pred_check_branch
      %12 = sbr.rel (0) target = $region5
    $region4: #{tpu_custom_call.1} parent=1 // pred_region
      %s14 = ssub.s32 2048, 2048
      %15 = vsyncadd [#allocation3], %s14
      %s16 = sshll.u32 [#allocation2], 4
      %s17 = int_to_ptr.vmem [resolvable:$true] %s16
      %22 = dma.hbm_to_vmem [thread:$0]  %s0, 2048, %s17, [#allocation3], 128, 128, 8
    $region5: #{tpu_custom_call.1} parent=1 // pred_fallthru
      _
    // Predicated region
    $region6: #{tpu_custom_call.1} parent=1 // pred_check
      _
    $region7: #{tpu_custom_call.1} parent=1 // pred_check_branch
      %24 = sbr.rel (0) target = $region9
    $region8: #{tpu_custom_call.1} parent=1 // pred_region
      %s26 = ssub.s32 8192, 8192
      %27 = vsyncadd [#allocation6], %s26
      %s28 = sshll.u32 [#allocation5], 4
      %s29 = int_to_ptr.vmem [resolvable:$true] %s28
      %34 = dma.hbm_to_vmem [thread:$0]  %s1, 8192, %s29, [#allocation6], 128, 128, 8
    $region9: #{tpu_custom_call.1} parent=1 // pred_fallthru
      _
    // Predicated region
    $region10: #{tpu_custom_call.1} parent=1 // pred_check
      _
    $region11: #{tpu_custom_call.1} parent=1 // pred_check_branch
      %36 = sbr.rel (0) target = $region13
    $region12: #{tpu_custom_call.1} parent=1 // pred_region
      _
    $region13: #{tpu_custom_call.1} parent=1 // pred_fallthru
      _
    // Predicated region
    $region14: #{tpu_custom_call.1} parent=1 // pred_check
      _
    $region15: #{tpu_custom_call.1} parent=1 // pred_check_branch
      %38 = sbr.rel (0) target = $region17
    $region16: #{tpu_custom_call.1} parent=1 // pred_region
      %39 = dma.done [#allocation3], 2048
    $region17: #{tpu_custom_call.1} parent=1 // pred_fallthru
      _
    // Predicated region
    $region18: #{tpu_custom_call.1} parent=1 // pred_check
      _
    $region19: #{tpu_custom_call.1} parent=1 // pred_check_branch
      %41 = sbr.rel (0) target = $region21
    $region20: #{tpu_custom_call.1} parent=1 // pred_region
      %42 = dma.done [#allocation6], 8192
    $region21: #{tpu_custom_call.1} parent=1 // pred_fallthru
      _
    %v43 = vld [vmem:[#allocation2] sm:$0xff]
    %v44 = vld [vmem:[#allocation2 + $0x8] sm:$0xff]
    %v45 = vld [vmem:[#allocation2 + $0x10] sm:$0xff]
    %v46 = vld [vmem:[#allocation2 + $0x18] sm:$0xff]
    %v47 = vld [vmem:[#allocation2 + $0x20] sm:$0xff]
    %v48 = vld [vmem:[#allocation2 + $0x28] sm:$0xff]
    %v49 = vld [vmem:[#allocation2 + $0x30] sm:$0xff]
    %v50 = vld [vmem:[#allocation2 + $0x38] sm:$0xff]
    %v51 = vld [vmem:[#allocation2 + $0x40] sm:$0xff]
    %v52 = vld [vmem:[#allocation2 + $0x48] sm:$0xff]
    %v53 = vld [vmem:[#allocation2 + $0x50] sm:$0xff]
    %v54 = vld [vmem:[#allocation2 + $0x58] sm:$0xff]
    %v55 = vld [vmem:[#allocation2 + $0x60] sm:$0xff]
    %v56 = vld [vmem:[#allocation2 + $0x68] sm:$0xff]
    %v57 = vld [vmem:[#allocation2 + $0x70] sm:$0xff]
    %v58 = vld [vmem:[#allocation2 + $0x78] sm:$0xff]
    %v59 = vld [vmem:[#allocation5] sm:$0xff]
    %v60 = vld [vmem:[#allocation5 + $0x8] sm:$0xff]
    %v61 = vld [vmem:[#allocation5 + $0x10] sm:$0xff]
    %v62 = vld [vmem:[#allocation5 + $0x18] sm:$0xff]
    %v63 = vld [vmem:[#allocation5 + $0x20] sm:$0xff]
    %v64 = vld [vmem:[#allocation5 + $0x28] sm:$0xff]
    %v65 = vld [vmem:[#allocation5 + $0x30] sm:$0xff]
    %v66 = vld [vmem:[#allocation5 + $0x38] sm:$0xff]
    %v67 = vld [vmem:[#allocation5 + $0x40] sm:$0xff]
    %v68 = vld [vmem:[#allocation5 + $0x48] sm:$0xff]
    %v69 = vld [vmem:[#allocation5 + $0x50] sm:$0xff]
    %v70 = vld [vmem:[#allocation5 + $0x58] sm:$0xff]
    %v71 = vld [vmem:[#allocation5 + $0x60] sm:$0xff]
    %v72 = vld [vmem:[#allocation5 + $0x68] sm:$0xff]
    %v73 = vld [vmem:[#allocation5 + $0x70] sm:$0xff]
    %v74 = vld [vmem:[#allocation5 + $0x78] sm:$0xff]
    %v75 = vld [vmem:[#allocation5 + $0x80] sm:$0xff]
    %v76 = vld [vmem:[#allocation5 + $0x88] sm:$0xff]
    %v77 = vld [vmem:[#allocation5 + $0x90] sm:$0xff]
    %v78 = vld [vmem:[#allocation5 + $0x98] sm:$0xff]
    %v79 = vld [vmem:[#allocation5 + $0xa0] sm:$0xff]
    %v80 = vld [vmem:[#allocation5 + $0xa8] sm:$0xff]
    %v81 = vld [vmem:[#allocation5 + $0xb0] sm:$0xff]
    %v82 = vld [vmem:[#allocation5 + $0xb8] sm:$0xff]
    %v83 = vld [vmem:[#allocation5 + $0xc0] sm:$0xff]
    %v84 = vld [vmem:[#allocation5 + $0xc8] sm:$0xff]
    %v85 = vld [vmem:[#allocation5 + $0xd0] sm:$0xff]
    %v86 = vld [vmem:[#allocation5 + $0xd8] sm:$0xff]
    %v87 = vld [vmem:[#allocation5 + $0xe0] sm:$0xff]
    %v88 = vld [vmem:[#allocation5 + $0xe8] sm:$0xff]
    %v89 = vld [vmem:[#allocation5 + $0xf0] sm:$0xff]
    %v90 = vld [vmem:[#allocation5 + $0xf8] sm:$0xff]
    %v91 = vld [vmem:[#allocation5 + $0x100] sm:$0xff]
    %v92 = vld [vmem:[#allocation5 + $0x108] sm:$0xff]
    %v93 = vld [vmem:[#allocation5 + $0x110] sm:$0xff]
    %v94 = vld [vmem:[#allocation5 + $0x118] sm:$0xff]
    %v95 = vld [vmem:[#allocation5 + $0x120] sm:$0xff]
    %v96 = vld [vmem:[#allocation5 + $0x128] sm:$0xff]
    %v97 = vld [vmem:[#allocation5 + $0x130] sm:$0xff]
    %v98 = vld [vmem:[#allocation5 + $0x138] sm:$0xff]
    %v99 = vld [vmem:[#allocation5 + $0x140] sm:$0xff]
    %v100 = vld [vmem:[#allocation5 + $0x148] sm:$0xff]
    %v101 = vld [vmem:[#allocation5 + $0x150] sm:$0xff]
    %v102 = vld [vmem:[#allocation5 + $0x158] sm:$0xff]
    %v103 = vld [vmem:[#allocation5 + $0x160] sm:$0xff]
    %v104 = vld [vmem:[#allocation5 + $0x168] sm:$0xff]
    %v105 = vld [vmem:[#allocation5 + $0x170] sm:$0xff]
    %v106 = vld [vmem:[#allocation5 + $0x178] sm:$0xff]
    %v107 = vld [vmem:[#allocation5 + $0x180] sm:$0xff]
    %v108 = vld [vmem:[#allocation5 + $0x188] sm:$0xff]
    %v109 = vld [vmem:[#allocation5 + $0x190] sm:$0xff]
    %v110 = vld [vmem:[#allocation5 + $0x198] sm:$0xff]
    %v111 = vld [vmem:[#allocation5 + $0x1a0] sm:$0xff]
    %v112 = vld [vmem:[#allocation5 + $0x1a8] sm:$0xff]
    %v113 = vld [vmem:[#allocation5 + $0x1b0] sm:$0xff]
    %v114 = vld [vmem:[#allocation5 + $0x1b8] sm:$0xff]
    %v115 = vld [vmem:[#allocation5 + $0x1c0] sm:$0xff]
    %v116 = vld [vmem:[#allocation5 + $0x1c8] sm:$0xff]
    %v117 = vld [vmem:[#allocation5 + $0x1d0] sm:$0xff]
    %v118 = vld [vmem:[#allocation5 + $0x1d8] sm:$0xff]
    %v119 = vld [vmem:[#allocation5 + $0x1e0] sm:$0xff]
    %v120 = vld [vmem:[#allocation5 + $0x1e8] sm:$0xff]
    %v121 = vld [vmem:[#allocation5 + $0x1f0] sm:$0xff]
    %v122 = vld [vmem:[#allocation5 + $0x1f8] sm:$0xff]
    %v123 = vld [vmem:[%s2] sm:$0xf]
    %v125 = vlaneseq
    %v126 = vshrl.u32 %v125, 7
    %v127 = vsub.s32 0, %v126
    %v128 = vrot.slane %v123, %v127
    %v129 = vlaneseq
    %v130 = vshrl.u32 %v129, 7
    %v131 = vsub.s32 1, %v130
    %v132 = vrot.slane %v123, %v131
    %v133 = vlaneseq
    %v134 = vshrl.u32 %v133, 7
    %v135 = vsub.s32 2, %v134
    %v136 = vrot.slane %v123, %v135
    %v137 = vlaneseq
    %v138 = vshrl.u32 %v137, 7
    %v139 = vsub.s32 3, %v138
    %v140 = vrot.slane %v123, %v139
    %145 = vmatprep.subr.mxu0 0.0
    %146 = vmatpush1.xpose.msra.mxu0 %v59
    %147 = vmatprep.subr.mxu0 0.0
    %148 = vmatpush1.xpose.msra.mxu0 %v60
    %149 = vmatprep.subr.mxu0 0.0
    %150 = vmatpush1.xpose.msra.mxu0 %v61
    %151 = vmatprep.subr.mxu0 0.0
    %152 = vmatpush1.xpose.msra.mxu0 %v62
    %153 = vmatprep.subr.mxu0 0.0
    %154 = vmatpush1.xpose.msra.mxu0 %v63
    %155 = vmatprep.subr.mxu0 0.0
    %156 = vmatpush1.xpose.msra.mxu0 %v64
    %157 = vmatprep.subr.mxu0 0.0
    %158 = vmatpush1.xpose.msra.mxu0 %v65
    %159 = vmatprep.subr.mxu0 0.0
    %160 = vmatpush1.xpose.msra.mxu0 %v66
    %161 = vmatprep.subr.mxu0 0.0
    %162 = vmatpush1.xpose.msra.mxu0 %v67
    %163 = vmatprep.subr.mxu0 0.0
    %164 = vmatpush1.xpose.msra.mxu0 %v68
    %165 = vmatprep.subr.mxu0 0.0
    %166 = vmatpush1.xpose.msra.mxu0 %v69
    %167 = vmatprep.subr.mxu0 0.0
    %168 = vmatpush1.xpose.msra.mxu0 %v70
    %169 = vmatprep.subr.mxu0 0.0
    %170 = vmatpush1.xpose.msra.mxu0 %v71
    %171 = vmatprep.subr.mxu0 0.0
    %172 = vmatpush1.xpose.msra.mxu0 %v72
    %173 = vmatprep.subr.mxu0 0.0
    %174 = vmatpush1.xpose.msra.mxu0 %v73
    %175 = vmatprep.subr.mxu0 0.0
    %176 = vmatpush1.xpose.msra.mxu0 %v74
    %177 = vmatprep.subr.mxu0 0.0
    %178 = vmatpush1.xpose.msra.mxu0 %v75
    %179 = vmatprep.subr.mxu0 0.0
    %180 = vmatpush1.xpose.msra.mxu0 %v76
    %181 = vmatprep.subr.mxu0 0.0
    %182 = vmatpush1.xpose.msra.mxu0 %v77
    %183 = vmatprep.subr.mxu0 0.0
    %184 = vmatpush1.xpose.msra.mxu0 %v78
    %185 = vmatprep.subr.mxu0 0.0
    %186 = vmatpush1.xpose.msra.mxu0 %v79
    %187 = vmatprep.subr.mxu0 0.0
    %188 = vmatpush1.xpose.msra.mxu0 %v80
    %189 = vmatprep.subr.mxu0 0.0
    %190 = vmatpush1.xpose.msra.mxu0 %v81
    %191 = vmatprep.subr.mxu0 0.0
    %192 = vmatpush1.xpose.msra.mxu0 %v82
    %193 = vmatprep.subr.mxu0 0.0
    %194 = vmatpush1.xpose.msra.mxu0 %v83
    %195 = vmatprep.subr.mxu0 0.0
    %196 = vmatpush1.xpose.msra.mxu0 %v84
    %197 = vmatprep.subr.mxu0 0.0
    %198 = vmatpush1.xpose.msra.mxu0 %v85
    %199 = vmatprep.subr.mxu0 0.0
    %200 = vmatpush1.xpose.msra.mxu0 %v86
    %201 = vmatprep.subr.mxu0 0.0
    %202 = vmatpush1.xpose.msra.mxu0 %v87
    %203 = vmatprep.subr.mxu0 0.0
    %204 = vmatpush1.xpose.msra.mxu0 %v88
    %205 = vmatprep.subr.mxu0 0.0
    %206 = vmatpush1.xpose.msra.mxu0 %v89
    %207 = vmatprep.subr.mxu0 0.0
    %208 = vmatpush1.xpose.msra.mxu0 %v90
    %209 = vmatprep.mubr.f32.mxu0 0.0
    %210 = vmatmul.mubr.f32.gmra.mrb[0].mxu0 %v43
    %v211 = vpop.f32.mrb[0].mxu0
    %v212 = vadd.f32 %v128, %v211
    %v213 = vpop.f32.mrb[0].mxu0
    %v214 = vadd.f32 %v132, %v213
    %215 = vmatprep.mubr.f32.mxu0 0.0
    %216 = vmatmul.mubr.f32.gmra.mrb[0].mxu0 %v44
    %v217 = vpop.f32.mrb[0].mxu0
    %v218 = vadd.f32 %v128, %v217
    %v219 = vpop.f32.mrb[0].mxu0
    %v220 = vadd.f32 %v132, %v219
    %221 = vmatprep.mubr.f32.mxu0 0.0
    %222 = vmatmul.mubr.f32.gmra.mrb[0].mxu0 %v45
    %v223 = vpop.f32.mrb[0].mxu0
    %v224 = vadd.f32 %v128, %v223
    %v225 = vpop.f32.mrb[0].mxu0
    %v226 = vadd.f32 %v132, %v225
    %227 = vmatprep.mubr.f32.mxu0 0.0
    %228 = vmatmul.mubr.f32.gmra.mrb[0].mxu0 %v46
    %v229 = vpop.f32.mrb[0].mxu0
    %v230 = vadd.f32 %v128, %v229
    %v231 = vpop.f32.mrb[0].mxu0
    %v232 = vadd.f32 %v132, %v231
    %233 = vmatprep.mubr.f32.mxu0 0.0
    %234 = vmatmul.mubr.f32.gmra.mrb[0].mxu0 %v47
    %v235 = vpop.f32.mrb[0].mxu0
    %v236 = vadd.f32 %v128, %v235
    %v237 = vpop.f32.mrb[0].mxu0
    %v238 = vadd.f32 %v132, %v237
    %239 = vmatprep.mubr.f32.mxu0 0.0
    %240 = vmatmul.mubr.f32.gmra.mrb[0].mxu0 %v48
    %v241 = vpop.f32.mrb[0].mxu0
    %v242 = vadd.f32 %v128, %v241
    %v243 = vpop.f32.mrb[0].mxu0
    %v244 = vadd.f32 %v132, %v243
    %245 = vmatprep.mubr.f32.mxu0 0.0
    %246 = vmatmul.mubr.f32.gmra.mrb[0].mxu0 %v49
    %v247 = vpop.f32.mrb[0].mxu0
    %v248 = vadd.f32 %v128, %v247
    %v249 = vpop.f32.mrb[0].mxu0
    %v250 = vadd.f32 %v132, %v249
    %251 = vmatprep.mubr.f32.mxu0 0.0
    %252 = vmatmul.mubr.f32.gmra.mrb[0].mxu0 %v50
    %v253 = vpop.f32.mrb[0].mxu0
    %v254 = vadd.f32 %v128, %v253
    %v255 = vpop.f32.mrb[0].mxu0
    %v256 = vadd.f32 %v132, %v255
    %257 = vmatprep.mubr.f32.mxu0 0.0
    %258 = vmatmul.mubr.f32.gmra.mrb[0].mxu0 %v51
    %v259 = vpop.f32.mrb[0].mxu0
    %v260 = vadd.f32 %v128, %v259
    %v261 = vpop.f32.mrb[0].mxu0
    %v262 = vadd.f32 %v132, %v261
    %263 = vmatprep.mubr.f32.mxu0 0.0
    %264 = vmatmul.mubr.f32.gmra.mrb[0].mxu0 %v52
    %v265 = vpop.f32.mrb[0].mxu0
    %v266 = vadd.f32 %v128, %v265
    %v267 = vpop.f32.mrb[0].mxu0
    %v268 = vadd.f32 %v132, %v267
    %269 = vmatprep.mubr.f32.mxu0 0.0
    %270 = vmatmul.mubr.f32.gmra.mrb[0].mxu0 %v53
    %v271 = vpop.f32.mrb[0].mxu0
    %v272 = vadd.f32 %v128, %v271
    %v273 = vpop.f32.mrb[0].mxu0
    %v274 = vadd.f32 %v132, %v273
    %275 = vmatprep.mubr.f32.mxu0 0.0
    %276 = vmatmul.mubr.f32.gmra.mrb[0].mxu0 %v54
    %v277 = vpop.f32.mrb[0].mxu0
    %v278 = vadd.f32 %v128, %v277
    %v279 = vpop.f32.mrb[0].mxu0
    %v280 = vadd.f32 %v132, %v279
    %281 = vmatprep.mubr.f32.mxu0 0.0
    %282 = vmatmul.mubr.f32.gmra.mrb[0].mxu0 %v55
    %v283 = vpop.f32.mrb[0].mxu0
    %v284 = vadd.f32 %v128, %v283
    %v285 = vpop.f32.mrb[0].mxu0
    %v286 = vadd.f32 %v132, %v285
    %287 = vmatprep.mubr.f32.mxu0 0.0
    %288 = vmatmul.mubr.f32.gmra.mrb[0].mxu0 %v56
    %v289 = vpop.f32.mrb[0].mxu0
    %v290 = vadd.f32 %v128, %v289
    %v291 = vpop.f32.mrb[0].mxu0
    %v292 = vadd.f32 %v132, %v291
    %293 = vmatprep.mubr.f32.mxu0 0.0
    %294 = vmatmul.mubr.f32.gmra.mrb[0].mxu0 %v57
    %v295 = vpop.f32.mrb[0].mxu0
    %v296 = vadd.f32 %v128, %v295
    %v297 = vpop.f32.mrb[0].mxu0
    %v298 = vadd.f32 %v132, %v297
    %299 = vmatprep.mubr.f32.mxu0 0.0
    %300 = vmatmul.mubr.f32.gmra.mrb[0].mxu0 %v58
    %v301 = vpop.f32.mrb[0].mxu0
    %v302 = vadd.f32 %v128, %v301
    %v303 = vpop.f32.mrb[0].mxu0
    %v304 = vadd.f32 %v132, %v303
    %305 = vdwg.mxu0
    %306 = vmatprep.subr.mxu0 0.0
    %307 = vmatpush1.xpose.msra.mxu0 %v91
    %308 = vmatprep.subr.mxu0 0.0
    %309 = vmatpush1.xpose.msra.mxu0 %v92
    %310 = vmatprep.subr.mxu0 0.0
    %311 = vmatpush1.xpose.msra.mxu0 %v93
    %312 = vmatprep.subr.mxu0 0.0
    %313 = vmatpush1.xpose.msra.mxu0 %v94
    %314 = vmatprep.subr.mxu0 0.0
    %315 = vmatpush1.xpose.msra.mxu0 %v95
    %316 = vmatprep.subr.mxu0 0.0
    %317 = vmatpush1.xpose.msra.mxu0 %v96
    %318 = vmatprep.subr.mxu0 0.0
    %319 = vmatpush1.xpose.msra.mxu0 %v97
    %320 = vmatprep.subr.mxu0 0.0
    %321 = vmatpush1.xpose.msra.mxu0 %v98
    %322 = vmatprep.subr.mxu0 0.0
    %323 = vmatpush1.xpose.msra.mxu0 %v99
    %324 = vmatprep.subr.mxu0 0.0
    %325 = vmatpush1.xpose.msra.mxu0 %v100
    %326 = vmatprep.subr.mxu0 0.0
    %327 = vmatpush1.xpose.msra.mxu0 %v101
    %328 = vmatprep.subr.mxu0 0.0
    %329 = vmatpush1.xpose.msra.mxu0 %v102
    %330 = vmatprep.subr.mxu0 0.0
    %331 = vmatpush1.xpose.msra.mxu0 %v103
    %332 = vmatprep.subr.mxu0 0.0
    %333 = vmatpush1.xpose.msra.mxu0 %v104
    %334 = vmatprep.subr.mxu0 0.0
    %335 = vmatpush1.xpose.msra.mxu0 %v105
    %336 = vmatprep.subr.mxu0 0.0
    %337 = vmatpush1.xpose.msra.mxu0 %v106
    %338 = vmatprep.subr.mxu0 0.0
    %339 = vmatpush1.xpose.msra.mxu0 %v107
    %340 = vmatprep.subr.mxu0 0.0
    %341 = vmatpush1.xpose.msra.mxu0 %v108
    %342 = vmatprep.subr.mxu0 0.0
    %343 = vmatpush1.xpose.msra.mxu0 %v109
    %344 = vmatprep.subr.mxu0 0.0
    %345 = vmatpush1.xpose.msra.mxu0 %v110
    %346 = vmatprep.subr.mxu0 0.0
    %347 = vmatpush1.xpose.msra.mxu0 %v111
    %348 = vmatprep.subr.mxu0 0.0
    %349 = vmatpush1.xpose.msra.mxu0 %v112
    %350 = vmatprep.subr.mxu0 0.0
    %351 = vmatpush1.xpose.msra.mxu0 %v113
    %352 = vmatprep.subr.mxu0 0.0
    %353 = vmatpush1.xpose.msra.mxu0 %v114
    %354 = vmatprep.subr.mxu0 0.0
    %355 = vmatpush1.xpose.msra.mxu0 %v115
    %356 = vmatprep.subr.mxu0 0.0
    %357 = vmatpush1.xpose.msra.mxu0 %v116
    %358 = vmatprep.subr.mxu0 0.0
    %359 = vmatpush1.xpose.msra.mxu0 %v117
    %360 = vmatprep.subr.mxu0 0.0
    %361 = vmatpush1.xpose.msra.mxu0 %v118
    %362 = vmatprep.subr.mxu0 0.0
    %363 = vmatpush1.xpose.msra.mxu0 %v119
    %364 = vmatprep.subr.mxu0 0.0
    %365 = vmatpush1.xpose.msra.mxu0 %v120
    %366 = vmatprep.subr.mxu0 0.0
    %367 = vmatpush1.xpose.msra.mxu0 %v121
    %368 = vmatprep.subr.mxu0 0.0
    %369 = vmatpush1.xpose.msra.mxu0 %v122
    %370 = vmatprep.mubr.f32.mxu0 0.0
    %371 = vmatmul.mubr.f32.gmra.mrb[0].mxu0 %v43
    %v372 = vpop.f32.mrb[0].mxu0
    %v373 = vadd.f32 %v136, %v372
    %v374 = vpop.f32.mrb[0].mxu0
    %v375 = vadd.f32 %v140, %v374
    %376 = vmatprep.mubr.f32.mxu0 0.0
    %377 = vmatmul.mubr.f32.gmra.mrb[0].mxu0 %v44
    %v378 = vpop.f32.mrb[0].mxu0
    %v379 = vadd.f32 %v136, %v378
    %v380 = vpop.f32.mrb[0].mxu0
    %v381 = vadd.f32 %v140, %v380
    %382 = vmatprep.mubr.f32.mxu0 0.0
    %383 = vmatmul.mubr.f32.gmra.mrb[0].mxu0 %v45
    %v384 = vpop.f32.mrb[0].mxu0
    %v385 = vadd.f32 %v136, %v384
    %v386 = vpop.f32.mrb[0].mxu0
    %v387 = vadd.f32 %v140, %v386
    %388 = vmatprep.mubr.f32.mxu0 0.0
    %389 = vmatmul.mubr.f32.gmra.mrb[0].mxu0 %v46
    %v390 = vpop.f32.mrb[0].mxu0
    %v391 = vadd.f32 %v136, %v390
    %v392 = vpop.f32.mrb[0].mxu0
    %v393 = vadd.f32 %v140, %v392
    %394 = vmatprep.mubr.f32.mxu0 0.0
    %395 = vmatmul.mubr.f32.gmra.mrb[0].mxu0 %v47
    %v396 = vpop.f32.mrb[0].mxu0
    %v397 = vadd.f32 %v136, %v396
    %v398 = vpop.f32.mrb[0].mxu0
    %v399 = vadd.f32 %v140, %v398
    %400 = vmatprep.mubr.f32.mxu0 0.0
    %401 = vmatmul.mubr.f32.gmra.mrb[0].mxu0 %v48
    %v402 = vpop.f32.mrb[0].mxu0
    %v403 = vadd.f32 %v136, %v402
    %v404 = vpop.f32.mrb[0].mxu0
    %v405 = vadd.f32 %v140, %v404
    %406 = vmatprep.mubr.f32.mxu0 0.0
    %407 = vmatmul.mubr.f32.gmra.mrb[0].mxu0 %v49
    %v408 = vpop.f32.mrb[0].mxu0
    %v409 = vadd.f32 %v136, %v408
    %v410 = vpop.f32.mrb[0].mxu0
    %v411 = vadd.f32 %v140, %v410
    %412 = vmatprep.mubr.f32.mxu0 0.0
    %413 = vmatmul.mubr.f32.gmra.mrb[0].mxu0 %v50
    %v414 = vpop.f32.mrb[0].mxu0
    %v415 = vadd.f32 %v136, %v414
    %v416 = vpop.f32.mrb[0].mxu0
    %v417 = vadd.f32 %v140, %v416
    %418 = vmatprep.mubr.f32.mxu0 0.0
    %419 = vmatmul.mubr.f32.gmra.mrb[0].mxu0 %v51
    %v420 = vpop.f32.mrb[0].mxu0
    %v421 = vadd.f32 %v136, %v420
    %v422 = vpop.f32.mrb[0].mxu0
    %v423 = vadd.f32 %v140, %v422
    %424 = vmatprep.mubr.f32.mxu0 0.0
    %425 = vmatmul.mubr.f32.gmra.mrb[0].mxu0 %v52
    %v426 = vpop.f32.mrb[0].mxu0
    %v427 = vadd.f32 %v136, %v426
    %v428 = vpop.f32.mrb[0].mxu0
    %v429 = vadd.f32 %v140, %v428
    %430 = vmatprep.mubr.f32.mxu0 0.0
    %431 = vmatmul.mubr.f32.gmra.mrb[0].mxu0 %v53
    %v432 = vpop.f32.mrb[0].mxu0
    %v433 = vadd.f32 %v136, %v432
    %v434 = vpop.f32.mrb[0].mxu0
    %v435 = vadd.f32 %v140, %v434
    %436 = vmatprep.mubr.f32.mxu0 0.0
    %437 = vmatmul.mubr.f32.gmra.mrb[0].mxu0 %v54
    %v438 = vpop.f32.mrb[0].mxu0
    %v439 = vadd.f32 %v136, %v438
    %v440 = vpop.f32.mrb[0].mxu0
    %v441 = vadd.f32 %v140, %v440
    %442 = vmatprep.mubr.f32.mxu0 0.0
    %443 = vmatmul.mubr.f32.gmra.mrb[0].mxu0 %v55
    %v444 = vpop.f32.mrb[0].mxu0
    %v445 = vadd.f32 %v136, %v444
    %v446 = vpop.f32.mrb[0].mxu0
    %v447 = vadd.f32 %v140, %v446
    %448 = vmatprep.mubr.f32.mxu0 0.0
    %449 = vmatmul.mubr.f32.gmra.mrb[0].mxu0 %v56
    %v450 = vpop.f32.mrb[0].mxu0
    %v451 = vadd.f32 %v136, %v450
    %v452 = vpop.f32.mrb[0].mxu0
    %v453 = vadd.f32 %v140, %v452
    %454 = vmatprep.mubr.f32.mxu0 0.0
    %455 = vmatmul.mubr.f32.gmra.mrb[0].mxu0 %v57
    %v456 = vpop.f32.mrb[0].mxu0
    %v457 = vadd.f32 %v136, %v456
    %v458 = vpop.f32.mrb[0].mxu0
    %v459 = vadd.f32 %v140, %v458
    %460 = vmatprep.mubr.f32.mxu0 0.0
    %461 = vmatmul.mubr.f32.gmra.mrb[0].mxu0 %v58
    %v462 = vpop.f32.mrb[0].mxu0
    %v463 = vadd.f32 %v136, %v462
    %v464 = vpop.f32.mrb[0].mxu0
    %v465 = vadd.f32 %v140, %v464
    %466 = vdwg.mxu0
    %v467 = vmul.f32 %v212, 0.5
    %v468 = vmul.f32 %v214, 0.5
    %v469 = vmul.f32 %v373, 0.5
    %v470 = vmul.f32 %v375, 0.5
    %v471 = vmul.f32 %v218, 0.5
    %v472 = vmul.f32 %v220, 0.5
    %v473 = vmul.f32 %v379, 0.5
    %v474 = vmul.f32 %v381, 0.5
    %v475 = vmul.f32 %v224, 0.5
    %v476 = vmul.f32 %v226, 0.5
    %v477 = vmul.f32 %v385, 0.5
    %v478 = vmul.f32 %v387, 0.5
    %v479 = vmul.f32 %v230, 0.5
    %v480 = vmul.f32 %v232, 0.5
    %v481 = vmul.f32 %v391, 0.5
    %v482 = vmul.f32 %v393, 0.5
    %v483 = vmul.f32 %v236, 0.5
    %v484 = vmul.f32 %v238, 0.5
    %v485 = vmul.f32 %v397, 0.5
    %v486 = vmul.f32 %v399, 0.5
    %v487 = vmul.f32 %v242, 0.5
    %v488 = vmul.f32 %v244, 0.5
    %v489 = vmul.f32 %v403, 0.5
    %v490 = vmul.f32 %v405, 0.5
    %v491 = vmul.f32 %v248, 0.5
    %v492 = vmul.f32 %v250, 0.5
    %v493 = vmul.f32 %v409, 0.5
    %v494 = vmul.f32 %v411, 0.5
    %v495 = vmul.f32 %v254, 0.5
    %v496 = vmul.f32 %v256, 0.5
    %v497 = vmul.f32 %v415, 0.5
    %v498 = vmul.f32 %v417, 0.5
    %v499 = vmul.f32 %v260, 0.5
    %v500 = vmul.f32 %v262, 0.5
    %v501 = vmul.f32 %v421, 0.5
    %v502 = vmul.f32 %v423, 0.5
    %v503 = vmul.f32 %v266, 0.5
    %v504 = vmul.f32 %v268, 0.5
    %v505 = vmul.f32 %v427, 0.5
    %v506 = vmul.f32 %v429, 0.5
    %v507 = vmul.f32 %v272, 0.5
    %v508 = vmul.f32 %v274, 0.5
    %v509 = vmul.f32 %v433, 0.5
    %v510 = vmul.f32 %v435, 0.5
    %v511 = vmul.f32 %v278, 0.5
    %v512 = vmul.f32 %v280, 0.5
    %v513 = vmul.f32 %v439, 0.5
    %v514 = vmul.f32 %v441, 0.5
    %v515 = vmul.f32 %v284, 0.5
    %v516 = vmul.f32 %v286, 0.5
    %v517 = vmul.f32 %v445, 0.5
    %v518 = vmul.f32 %v447, 0.5
    %v519 = vmul.f32 %v290, 0.5
    %v520 = vmul.f32 %v292, 0.5
    %v521 = vmul.f32 %v451, 0.5
    %v522 = vmul.f32 %v453, 0.5
    %v523 = vmul.f32 %v296, 0.5
    %v524 = vmul.f32 %v298, 0.5
    %v525 = vmul.f32 %v457, 0.5
    %v526 = vmul.f32 %v459, 0.5
    %v527 = vmul.f32 %v302, 0.5
    %v528 = vmul.f32 %v304, 0.5
    %v529 = vmul.f32 %v463, 0.5
    %v530 = vmul.f32 %v465, 0.5
    %v531 = vmul.f32 %v212, 0.70710677
    %v532 = vmul.f32 %v214, 0.70710677
    %v533 = vmul.f32 %v373, 0.70710677
    %v534 = vmul.f32 %v375, 0.70710677
    %v535 = vmul.f32 %v218, 0.70710677
    %v536 = vmul.f32 %v220, 0.70710677
    %v537 = vmul.f32 %v379, 0.70710677
    %v538 = vmul.f32 %v381, 0.70710677
    %v539 = vmul.f32 %v224, 0.70710677
    %v540 = vmul.f32 %v226, 0.70710677
    %v541 = vmul.f32 %v385, 0.70710677
    %v542 = vmul.f32 %v387, 0.70710677
    %v543 = vmul.f32 %v230, 0.70710677
    %v544 = vmul.f32 %v232, 0.70710677
    %v545 = vmul.f32 %v391, 0.70710677
    %v546 = vmul.f32 %v393, 0.70710677
    %v547 = vmul.f32 %v236, 0.70710677
    %v548 = vmul.f32 %v238, 0.70710677
    %v549 = vmul.f32 %v397, 0.70710677
    %v550 = vmul.f32 %v399, 0.70710677
    %v551 = vmul.f32 %v242, 0.70710677
    %v552 = vmul.f32 %v244, 0.70710677
    %v553 = vmul.f32 %v403, 0.70710677
    %v554 = vmul.f32 %v405, 0.70710677
    %v555 = vmul.f32 %v248, 0.70710677
    %v556 = vmul.f32 %v250, 0.70710677
    %v557 = vmul.f32 %v409, 0.70710677
    %v558 = vmul.f32 %v411, 0.70710677
    %v559 = vmul.f32 %v254, 0.70710677
    %v560 = vmul.f32 %v256, 0.70710677
    %v561 = vmul.f32 %v415, 0.70710677
    %v562 = vmul.f32 %v417, 0.70710677
    %v563 = vmul.f32 %v260, 0.70710677
    %v564 = vmul.f32 %v262, 0.70710677
    %v565 = vmul.f32 %v421, 0.70710677
    %v566 = vmul.f32 %v423, 0.70710677
    %v567 = vmul.f32 %v266, 0.70710677
    %v568 = vmul.f32 %v268, 0.70710677
    %v569 = vmul.f32 %v427, 0.70710677
    %v570 = vmul.f32 %v429, 0.70710677
    %v571 = vmul.f32 %v272, 0.70710677
    %v572 = vmul.f32 %v274, 0.70710677
    %v573 = vmul.f32 %v433, 0.70710677
    %v574 = vmul.f32 %v435, 0.70710677
    %v575 = vmul.f32 %v278, 0.70710677
    %v576 = vmul.f32 %v280, 0.70710677
    %v577 = vmul.f32 %v439, 0.70710677
    %v578 = vmul.f32 %v441, 0.70710677
    %v579 = vmul.f32 %v284, 0.70710677
    %v580 = vmul.f32 %v286, 0.70710677
    %v581 = vmul.f32 %v445, 0.70710677
    %v582 = vmul.f32 %v447, 0.70710677
    %v583 = vmul.f32 %v290, 0.70710677
    %v584 = vmul.f32 %v292, 0.70710677
    %v585 = vmul.f32 %v451, 0.70710677
    %v586 = vmul.f32 %v453, 0.70710677
    %v587 = vmul.f32 %v296, 0.70710677
    %v588 = vmul.f32 %v298, 0.70710677
    %v589 = vmul.f32 %v457, 0.70710677
    %v590 = vmul.f32 %v459, 0.70710677
    %v591 = vmul.f32 %v302, 0.70710677
    %v592 = vmul.f32 %v304, 0.70710677
    %v593 = vmul.f32 %v463, 0.70710677
    %v594 = vmul.f32 %v465, 0.70710677
    %v595 = vand.u32 2147483647, %v531
    %v596 = vand.u32 2147483647, %v532
    %v597 = vand.u32 2147483647, %v533
    %v598 = vand.u32 2147483647, %v534
    %v599 = vand.u32 2147483647, %v535
    %v600 = vand.u32 2147483647, %v536
    %v601 = vand.u32 2147483647, %v537
    %v602 = vand.u32 2147483647, %v538
    %v603 = vand.u32 2147483647, %v539
    %v604 = vand.u32 2147483647, %v540
    %v605 = vand.u32 2147483647, %v541
    %v606 = vand.u32 2147483647, %v542
    %v607 = vand.u32 2147483647, %v543
    %v608 = vand.u32 2147483647, %v544
    %v609 = vand.u32 2147483647, %v545
    %v610 = vand.u32 2147483647, %v546
    %v611 = vand.u32 2147483647, %v547
    %v612 = vand.u32 2147483647, %v548
    %v613 = vand.u32 2147483647, %v549
    %v614 = vand.u32 2147483647, %v550
    %v615 = vand.u32 2147483647, %v551
    %v616 = vand.u32 2147483647, %v552
    %v617 = vand.u32 2147483647, %v553
    %v618 = vand.u32 2147483647, %v554
    %v619 = vand.u32 2147483647, %v555
    %v620 = vand.u32 2147483647, %v556
    %v621 = vand.u32 2147483647, %v557
    %v622 = vand.u32 2147483647, %v558
    %v623 = vand.u32 2147483647, %v559
    %v624 = vand.u32 2147483647, %v560
    %v625 = vand.u32 2147483647, %v561
    %v626 = vand.u32 2147483647, %v562
    %v627 = vand.u32 2147483647, %v563
    %v628 = vand.u32 2147483647, %v564
    %v629 = vand.u32 2147483647, %v565
    %v630 = vand.u32 2147483647, %v566
    %v631 = vand.u32 2147483647, %v567
    %v632 = vand.u32 2147483647, %v568
    %v633 = vand.u32 2147483647, %v569
    %v634 = vand.u32 2147483647, %v570
    %v635 = vand.u32 2147483647, %v571
    %v636 = vand.u32 2147483647, %v572
    %v637 = vand.u32 2147483647, %v573
    %v638 = vand.u32 2147483647, %v574
    %v639 = vand.u32 2147483647, %v575
    %v640 = vand.u32 2147483647, %v576
    %v641 = vand.u32 2147483647, %v577
    %v642 = vand.u32 2147483647, %v578
    %v643 = vand.u32 2147483647, %v579
    %v644 = vand.u32 2147483647, %v580
    %v645 = vand.u32 2147483647, %v581
    %v646 = vand.u32 2147483647, %v582
    %v647 = vand.u32 2147483647, %v583
    %v648 = vand.u32 2147483647, %v584
    %v649 = vand.u32 2147483647, %v585
    %v650 = vand.u32 2147483647, %v586
    %v651 = vand.u32 2147483647, %v587
    %v652 = vand.u32 2147483647, %v588
    %v653 = vand.u32 2147483647, %v589
    %v654 = vand.u32 2147483647, %v590
    %v655 = vand.u32 2147483647, %v591
    %v656 = vand.u32 2147483647, %v592
    %v657 = vand.u32 2147483647, %v593
    %v658 = vand.u32 2147483647, %v594
    %v659 = vmul.f32 %v595, 0.3275911
    %v660 = vmul.f32 %v596, 0.3275911
    %v661 = vmul.f32 %v597, 0.3275911
    %v662 = vmul.f32 %v598, 0.3275911
    %v663 = vmul.f32 %v599, 0.3275911
    %v664 = vmul.f32 %v600, 0.3275911
    %v665 = vmul.f32 %v601, 0.3275911
    %v666 = vmul.f32 %v602, 0.3275911
    %v667 = vmul.f32 %v603, 0.3275911
    %v668 = vmul.f32 %v604, 0.3275911
    %v669 = vmul.f32 %v605, 0.3275911
    %v670 = vmul.f32 %v606, 0.3275911
    %v671 = vmul.f32 %v607, 0.3275911
    %v672 = vmul.f32 %v608, 0.3275911
    %v673 = vmul.f32 %v609, 0.3275911
    %v674 = vmul.f32 %v610, 0.3275911
    %v675 = vmul.f32 %v611, 0.3275911
    %v676 = vmul.f32 %v612, 0.3275911
    %v677 = vmul.f32 %v613, 0.3275911
    %v678 = vmul.f32 %v614, 0.3275911
    %v679 = vmul.f32 %v615, 0.3275911
    %v680 = vmul.f32 %v616, 0.3275911
    %v681 = vmul.f32 %v617, 0.3275911
    %v682 = vmul.f32 %v618, 0.3275911
    %v683 = vmul.f32 %v619, 0.3275911
    %v684 = vmul.f32 %v620, 0.3275911
    %v685 = vmul.f32 %v621, 0.3275911
    %v686 = vmul.f32 %v622, 0.3275911
    %v687 = vmul.f32 %v623, 0.3275911
    %v688 = vmul.f32 %v624, 0.3275911
    %v689 = vmul.f32 %v625, 0.3275911
    %v690 = vmul.f32 %v626, 0.3275911
    %v691 = vmul.f32 %v627, 0.3275911
    %v692 = vmul.f32 %v628, 0.3275911
    %v693 = vmul.f32 %v629, 0.3275911
    %v694 = vmul.f32 %v630, 0.3275911
    %v695 = vmul.f32 %v631, 0.3275911
    %v696 = vmul.f32 %v632, 0.3275911
    %v697 = vmul.f32 %v633, 0.3275911
    %v698 = vmul.f32 %v634, 0.3275911
    %v699 = vmul.f32 %v635, 0.3275911
    %v700 = vmul.f32 %v636, 0.3275911
    %v701 = vmul.f32 %v637, 0.3275911
    %v702 = vmul.f32 %v638, 0.3275911
    %v703 = vmul.f32 %v639, 0.3275911
    %v704 = vmul.f32 %v640, 0.3275911
    %v705 = vmul.f32 %v641, 0.3275911
    %v706 = vmul.f32 %v642, 0.3275911
    %v707 = vmul.f32 %v643, 0.3275911
    %v708 = vmul.f32 %v644, 0.3275911
    %v709 = vmul.f32 %v645, 0.3275911
    %v710 = vmul.f32 %v646, 0.3275911
    %v711 = vmul.f32 %v647, 0.3275911
    %v712 = vmul.f32 %v648, 0.3275911
    %v713 = vmul.f32 %v649, 0.3275911
    %v714 = vmul.f32 %v650, 0.3275911
    %v715 = vmul.f32 %v651, 0.3275911
    %v716 = vmul.f32 %v652, 0.3275911
    %v717 = vmul.f32 %v653, 0.3275911
    %v718 = vmul.f32 %v654, 0.3275911
    %v719 = vmul.f32 %v655, 0.3275911
    %v720 = vmul.f32 %v656, 0.3275911
    %v721 = vmul.f32 %v657, 0.3275911
    %v722 = vmul.f32 %v658, 0.3275911
    %v723 = vadd.f32 %v659, 1.0
    %v724 = vadd.f32 %v660, 1.0
    %v725 = vadd.f32 %v661, 1.0
    %v726 = vadd.f32 %v662, 1.0
    %v727 = vadd.f32 %v663, 1.0
    %v728 = vadd.f32 %v664, 1.0
    %v729 = vadd.f32 %v665, 1.0
    %v730 = vadd.f32 %v666, 1.0
    %v731 = vadd.f32 %v667, 1.0
    %v732 = vadd.f32 %v668, 1.0
    %v733 = vadd.f32 %v669, 1.0
    %v734 = vadd.f32 %v670, 1.0
    %v735 = vadd.f32 %v671, 1.0
    %v736 = vadd.f32 %v672, 1.0
    %v737 = vadd.f32 %v673, 1.0
    %v738 = vadd.f32 %v674, 1.0
    %v739 = vadd.f32 %v675, 1.0
    %v740 = vadd.f32 %v676, 1.0
    %v741 = vadd.f32 %v677, 1.0
    %v742 = vadd.f32 %v678, 1.0
    %v743 = vadd.f32 %v679, 1.0
    %v744 = vadd.f32 %v680, 1.0
    %v745 = vadd.f32 %v681, 1.0
    %v746 = vadd.f32 %v682, 1.0
    %v747 = vadd.f32 %v683, 1.0
    %v748 = vadd.f32 %v684, 1.0
    %v749 = vadd.f32 %v685, 1.0
    %v750 = vadd.f32 %v686, 1.0
    %v751 = vadd.f32 %v687, 1.0
    %v752 = vadd.f32 %v688, 1.0
    %v753 = vadd.f32 %v689, 1.0
    %v754 = vadd.f32 %v690, 1.0
    %v755 = vadd.f32 %v691, 1.0
    %v756 = vadd.f32 %v692, 1.0
    %v757 = vadd.f32 %v693, 1.0
    %v758 = vadd.f32 %v694, 1.0
    %v759 = vadd.f32 %v695, 1.0
    %v760 = vadd.f32 %v696, 1.0
    %v761 = vadd.f32 %v697, 1.0
    %v762 = vadd.f32 %v698, 1.0
    %v763 = vadd.f32 %v699, 1.0
    %v764 = vadd.f32 %v700, 1.0
    %v765 = vadd.f32 %v701, 1.0
    %v766 = vadd.f32 %v702, 1.0
    %v767 = vadd.f32 %v703, 1.0
    %v768 = vadd.f32 %v704, 1.0
    %v769 = vadd.f32 %v705, 1.0
    %v770 = vadd.f32 %v706, 1.0
    %v771 = vadd.f32 %v707, 1.0
    %v772 = vadd.f32 %v708, 1.0
    %v773 = vadd.f32 %v709, 1.0
    %v774 = vadd.f32 %v710, 1.0
    %v775 = vadd.f32 %v711, 1.0
    %v776 = vadd.f32 %v712, 1.0
    %v777 = vadd.f32 %v713, 1.0
    %v778 = vadd.f32 %v714, 1.0
    %v779 = vadd.f32 %v715, 1.0
    %v780 = vadd.f32 %v716, 1.0
    %v781 = vadd.f32 %v717, 1.0
    %v782 = vadd.f32 %v718, 1.0
    %v783 = vadd.f32 %v719, 1.0
    %v784 = vadd.f32 %v720, 1.0
    %v785 = vadd.f32 %v721, 1.0
    %v786 = vadd.f32 %v722, 1.0
    %v787 = vrcp.pop %v723
    %v788 = vmul.f32 1.0, %v787
    %v789 = vrcp.pop %v724
    %v790 = vmul.f32 1.0, %v789
    %v791 = vrcp.pop %v725
    %v792 = vmul.f32 1.0, %v791
    %v793 = vrcp.pop %v726
    %v794 = vmul.f32 1.0, %v793
    %v795 = vrcp.pop %v727
    %v796 = vmul.f32 1.0, %v795
    %v797 = vrcp.pop %v728
    %v798 = vmul.f32 1.0, %v797
    %v799 = vrcp.pop %v729
    %v800 = vmul.f32 1.0, %v799
    %v801 = vrcp.pop %v730
    %v802 = vmul.f32 1.0, %v801
    %v803 = vrcp.pop %v731
    %v804 = vmul.f32 1.0, %v803
    %v805 = vrcp.pop %v732
    %v806 = vmul.f32 1.0, %v805
    %v807 = vrcp.pop %v733
    %v808 = vmul.f32 1.0, %v807
    %v809 = vrcp.pop %v734
    %v810 = vmul.f32 1.0, %v809
    %v811 = vrcp.pop %v735
    %v812 = vmul.f32 1.0, %v811
    %v813 = vrcp.pop %v736
    %v814 = vmul.f32 1.0, %v813
    %v815 = vrcp.pop %v737
    %v816 = vmul.f32 1.0, %v815
    %v817 = vrcp.pop %v738
    %v818 = vmul.f32 1.0, %v817
    %v819 = vrcp.pop %v739
    %v820 = vmul.f32 1.0, %v819
    %v821 = vrcp.pop %v740
    %v822 = vmul.f32 1.0, %v821
    %v823 = vrcp.pop %v741
    %v824 = vmul.f32 1.0, %v823
    %v825 = vrcp.pop %v742
    %v826 = vmul.f32 1.0, %v825
    %v827 = vrcp.pop %v743
    %v828 = vmul.f32 1.0, %v827
    %v829 = vrcp.pop %v744
    %v830 = vmul.f32 1.0, %v829
    %v831 = vrcp.pop %v745
    %v832 = vmul.f32 1.0, %v831
    %v833 = vrcp.pop %v746
    %v834 = vmul.f32 1.0, %v833
    %v835 = vrcp.pop %v747
    %v836 = vmul.f32 1.0, %v835
    %v837 = vrcp.pop %v748
    %v838 = vmul.f32 1.0, %v837
    %v839 = vrcp.pop %v749
    %v840 = vmul.f32 1.0, %v839
    %v841 = vrcp.pop %v750
    %v842 = vmul.f32 1.0, %v841
    %v843 = vrcp.pop %v751
    %v844 = vmul.f32 1.0, %v843
    %v845 = vrcp.pop %v752
    %v846 = vmul.f32 1.0, %v845
    %v847 = vrcp.pop %v753
    %v848 = vmul.f32 1.0, %v847
    %v849 = vrcp.pop %v754
    %v850 = vmul.f32 1.0, %v849
    %v851 = vrcp.pop %v755
    %v852 = vmul.f32 1.0, %v851
    %v853 = vrcp.pop %v756
    %v854 = vmul.f32 1.0, %v853
    %v855 = vrcp.pop %v757
    %v856 = vmul.f32 1.0, %v855
    %v857 = vrcp.pop %v758
    %v858 = vmul.f32 1.0, %v857
    %v859 = vrcp.pop %v759
    %v860 = vmul.f32 1.0, %v859
    %v861 = vrcp.pop %v760
    %v862 = vmul.f32 1.0, %v861
    %v863 = vrcp.pop %v761
    %v864 = vmul.f32 1.0, %v863
    %v865 = vrcp.pop %v762
    %v866 = vmul.f32 1.0, %v865
    %v867 = vrcp.pop %v763
    %v868 = vmul.f32 1.0, %v867
    %v869 = vrcp.pop %v764
    %v870 = vmul.f32 1.0, %v869
    %v871 = vrcp.pop %v765
    %v872 = vmul.f32 1.0, %v871
    %v873 = vrcp.pop %v766
    %v874 = vmul.f32 1.0, %v873
    %v875 = vrcp.pop %v767
    %v876 = vmul.f32 1.0, %v875
    %v877 = vrcp.pop %v768
    %v878 = vmul.f32 1.0, %v877
    %v879 = vrcp.pop %v769
    %v880 = vmul.f32 1.0, %v879
    %v881 = vrcp.pop %v770
    %v882 = vmul.f32 1.0, %v881
    %v883 = vrcp.pop %v771
    %v884 = vmul.f32 1.0, %v883
    %v885 = vrcp.pop %v772
    %v886 = vmul.f32 1.0, %v885
    %v887 = vrcp.pop %v773
    %v888 = vmul.f32 1.0, %v887
    %v889 = vrcp.pop %v774
    %v890 = vmul.f32 1.0, %v889
    %v891 = vrcp.pop %v775
    %v892 = vmul.f32 1.0, %v891
    %v893 = vrcp.pop %v776
    %v894 = vmul.f32 1.0, %v893
    %v895 = vrcp.pop %v777
    %v896 = vmul.f32 1.0, %v895
    %v897 = vrcp.pop %v778
    %v898 = vmul.f32 1.0, %v897
    %v899 = vrcp.pop %v779
    %v900 = vmul.f32 1.0, %v899
    %v901 = vrcp.pop %v780
    %v902 = vmul.f32 1.0, %v901
    %v903 = vrcp.pop %v781
    %v904 = vmul.f32 1.0, %v903
    %v905 = vrcp.pop %v782
    %v906 = vmul.f32 1.0, %v905
    %v907 = vrcp.pop %v783
    %v908 = vmul.f32 1.0, %v907
    %v909 = vrcp.pop %v784
    %v910 = vmul.f32 1.0, %v909
    %v911 = vrcp.pop %v785
    %v912 = vmul.f32 1.0, %v911
    %v913 = vrcp.pop %v786
    %v914 = vmul.f32 1.0, %v913
    %v915 = vmul.f32 %v788, 1.0614054
    %v916 = vmul.f32 %v790, 1.0614054
    %v917 = vmul.f32 %v792, 1.0614054
    %v918 = vmul.f32 %v794, 1.0614054
    %v919 = vmul.f32 %v796, 1.0614054
    %v920 = vmul.f32 %v798, 1.0614054
    %v921 = vmul.f32 %v800, 1.0614054
    %v922 = vmul.f32 %v802, 1.0614054
    %v923 = vmul.f32 %v804, 1.0614054
    %v924 = vmul.f32 %v806, 1.0614054
    %v925 = vmul.f32 %v808, 1.0614054
    %v926 = vmul.f32 %v810, 1.0614054
    %v927 = vmul.f32 %v812, 1.0614054
    %v928 = vmul.f32 %v814, 1.0614054
    %v929 = vmul.f32 %v816, 1.0614054
    %v930 = vmul.f32 %v818, 1.0614054
    %v931 = vmul.f32 %v820, 1.0614054
    %v932 = vmul.f32 %v822, 1.0614054
    %v933 = vmul.f32 %v824, 1.0614054
    %v934 = vmul.f32 %v826, 1.0614054
    %v935 = vmul.f32 %v828, 1.0614054
    %v936 = vmul.f32 %v830, 1.0614054
    %v937 = vmul.f32 %v832, 1.0614054
    %v938 = vmul.f32 %v834, 1.0614054
    %v939 = vmul.f32 %v836, 1.0614054
    %v940 = vmul.f32 %v838, 1.0614054
    %v941 = vmul.f32 %v840, 1.0614054
    %v942 = vmul.f32 %v842, 1.0614054
    %v943 = vmul.f32 %v844, 1.0614054
    %v944 = vmul.f32 %v846, 1.0614054
    %v945 = vmul.f32 %v848, 1.0614054
    %v946 = vmul.f32 %v850, 1.0614054
    %v947 = vmul.f32 %v852, 1.0614054
    %v948 = vmul.f32 %v854, 1.0614054
    %v949 = vmul.f32 %v856, 1.0614054
    %v950 = vmul.f32 %v858, 1.0614054
    %v951 = vmul.f32 %v860, 1.0614054
    %v952 = vmul.f32 %v862, 1.0614054
    %v953 = vmul.f32 %v864, 1.0614054
    %v954 = vmul.f32 %v866, 1.0614054
    %v955 = vmul.f32 %v868, 1.0614054
    %v956 = vmul.f32 %v870, 1.0614054
    %v957 = vmul.f32 %v872, 1.0614054
    %v958 = vmul.f32 %v874, 1.0614054
    %v959 = vmul.f32 %v876, 1.0614054
    %v960 = vmul.f32 %v878, 1.0614054
    %v961 = vmul.f32 %v880, 1.0614054
    %v962 = vmul.f32 %v882, 1.0614054
    %v963 = vmul.f32 %v884, 1.0614054
    %v964 = vmul.f32 %v886, 1.0614054
    %v965 = vmul.f32 %v888, 1.0614054
    %v966 = vmul.f32 %v890, 1.0614054
    %v967 = vmul.f32 %v892, 1.0614054
    %v968 = vmul.f32 %v894, 1.0614054
    %v969 = vmul.f32 %v896, 1.0614054
    %v970 = vmul.f32 %v898, 1.0614054
    %v971 = vmul.f32 %v900, 1.0614054
    %v972 = vmul.f32 %v902, 1.0614054
    %v973 = vmul.f32 %v904, 1.0614054
    %v974 = vmul.f32 %v906, 1.0614054
    %v975 = vmul.f32 %v908, 1.0614054
    %v976 = vmul.f32 %v910, 1.0614054
    %v977 = vmul.f32 %v912, 1.0614054
    %v978 = vmul.f32 %v914, 1.0614054
    %v979 = vadd.f32 %v915, -1.4531521
    %v980 = vadd.f32 %v916, -1.4531521
    %v981 = vadd.f32 %v917, -1.4531521
    %v982 = vadd.f32 %v918, -1.4531521
    %v983 = vadd.f32 %v919, -1.4531521
    %v984 = vadd.f32 %v920, -1.4531521
    %v985 = vadd.f32 %v921, -1.4531521
    %v986 = vadd.f32 %v922, -1.4531521
    %v987 = vadd.f32 %v923, -1.4531521
    %v988 = vadd.f32 %v924, -1.4531521
    %v989 = vadd.f32 %v925, -1.4531521
    %v990 = vadd.f32 %v926, -1.4531521
    %v991 = vadd.f32 %v927, -1.4531521
    %v992 = vadd.f32 %v928, -1.4531521
    %v993 = vadd.f32 %v929, -1.4531521
    %v994 = vadd.f32 %v930, -1.4531521
    %v995 = vadd.f32 %v931, -1.4531521
    %v996 = vadd.f32 %v932, -1.4531521
    %v997 = vadd.f32 %v933, -1.4531521
    %v998 = vadd.f32 %v934, -1.4531521
    %v999 = vadd.f32 %v935, -1.4531521
    %v1000 = vadd.f32 %v936, -1.4531521
    %v1001 = vadd.f32 %v937, -1.4531521
    %v1002 = vadd.f32 %v938, -1.4531521
    %v1003 = vadd.f32 %v939, -1.4531521
    %v1004 = vadd.f32 %v940, -1.4531521
    %v1005 = vadd.f32 %v941, -1.4531521
    %v1006 = vadd.f32 %v942, -1.4531521
    %v1007 = vadd.f32 %v943, -1.4531521
    %v1008 = vadd.f32 %v944, -1.4531521
    %v1009 = vadd.f32 %v945, -1.4531521
    %v1010 = vadd.f32 %v946, -1.4531521
    %v1011 = vadd.f32 %v947, -1.4531521
    %v1012 = vadd.f32 %v948, -1.4531521
    %v1013 = vadd.f32 %v949, -1.4531521
    %v1014 = vadd.f32 %v950, -1.4531521
    %v1015 = vadd.f32 %v951, -1.4531521
    %v1016 = vadd.f32 %v952, -1.4531521
    %v1017 = vadd.f32 %v953, -1.4531521
    %v1018 = vadd.f32 %v954, -1.4531521
    %v1019 = vadd.f32 %v955, -1.4531521
    %v1020 = vadd.f32 %v956, -1.4531521
    %v1021 = vadd.f32 %v957, -1.4531521
    %v1022 = vadd.f32 %v958, -1.4531521
    %v1023 = vadd.f32 %v959, -1.4531521
    %v1024 = vadd.f32 %v960, -1.4531521
    %v1025 = vadd.f32 %v961, -1.4531521
    %v1026 = vadd.f32 %v962, -1.4531521
    %v1027 = vadd.f32 %v963, -1.4531521
    %v1028 = vadd.f32 %v964, -1.4531521
    %v1029 = vadd.f32 %v965, -1.4531521
    %v1030 = vadd.f32 %v966, -1.4531521
    %v1031 = vadd.f32 %v967, -1.4531521
    %v1032 = vadd.f32 %v968, -1.4531521
    %v1033 = vadd.f32 %v969, -1.4531521
    %v1034 = vadd.f32 %v970, -1.4531521
    %v1035 = vadd.f32 %v971, -1.4531521
    %v1036 = vadd.f32 %v972, -1.4531521
    %v1037 = vadd.f32 %v973, -1.4531521
    %v1038 = vadd.f32 %v974, -1.4531521
    %v1039 = vadd.f32 %v975, -1.4531521
    %v1040 = vadd.f32 %v976, -1.4531521
    %v1041 = vadd.f32 %v977, -1.4531521
    %v1042 = vadd.f32 %v978, -1.4531521
    %v1043 = vmul.f32 %v788, %v979
    %v1044 = vmul.f32 %v790, %v980
    %v1045 = vmul.f32 %v792, %v981
    %v1046 = vmul.f32 %v794, %v982
    %v1047 = vmul.f32 %v796, %v983
    %v1048 = vmul.f32 %v798, %v984
    %v1049 = vmul.f32 %v800, %v985
    %v1050 = vmul.f32 %v802, %v986
    %v1051 = vmul.f32 %v804, %v987
    %v1052 = vmul.f32 %v806, %v988
    %v1053 = vmul.f32 %v808, %v989
    %v1054 = vmul.f32 %v810, %v990
    %v1055 = vmul.f32 %v812, %v991
    %v1056 = vmul.f32 %v814, %v992
    %v1057 = vmul.f32 %v816, %v993
    %v1058 = vmul.f32 %v818, %v994
    %v1059 = vmul.f32 %v820, %v995
    %v1060 = vmul.f32 %v822, %v996
    %v1061 = vmul.f32 %v824, %v997
    %v1062 = vmul.f32 %v826, %v998
    %v1063 = vmul.f32 %v828, %v999
    %v1064 = vmul.f32 %v830, %v1000
    %v1065 = vmul.f32 %v832, %v1001
    %v1066 = vmul.f32 %v834, %v1002
    %v1067 = vmul.f32 %v836, %v1003
    %v1068 = vmul.f32 %v838, %v1004
    %v1069 = vmul.f32 %v840, %v1005
    %v1070 = vmul.f32 %v842, %v1006
    %v1071 = vmul.f32 %v844, %v1007
    %v1072 = vmul.f32 %v846, %v1008
    %v1073 = vmul.f32 %v848, %v1009
    %v1074 = vmul.f32 %v850, %v1010
    %v1075 = vmul.f32 %v852, %v1011
    %v1076 = vmul.f32 %v854, %v1012
    %v1077 = vmul.f32 %v856, %v1013
    %v1078 = vmul.f32 %v858, %v1014
    %v1079 = vmul.f32 %v860, %v1015
    %v1080 = vmul.f32 %v862, %v1016
    %v1081 = vmul.f32 %v864, %v1017
    %v1082 = vmul.f32 %v866, %v1018
    %v1083 = vmul.f32 %v868, %v1019
    %v1084 = vmul.f32 %v870, %v1020
    %v1085 = vmul.f32 %v872, %v1021
    %v1086 = vmul.f32 %v874, %v1022
    %v1087 = vmul.f32 %v876, %v1023
    %v1088 = vmul.f32 %v878, %v1024
    %v1089 = vmul.f32 %v880, %v1025
    %v1090 = vmul.f32 %v882, %v1026
    %v1091 = vmul.f32 %v884, %v1027
    %v1092 = vmul.f32 %v886, %v1028
    %v1093 = vmul.f32 %v888, %v1029
    %v1094 = vmul.f32 %v890, %v1030
    %v1095 = vmul.f32 %v892, %v1031
    %v1096 = vmul.f32 %v894, %v1032
    %v1097 = vmul.f32 %v896, %v1033
    %v1098 = vmul.f32 %v898, %v1034
    %v1099 = vmul.f32 %v900, %v1035
    %v1100 = vmul.f32 %v902, %v1036
    %v1101 = vmul.f32 %v904, %v1037
    %v1102 = vmul.f32 %v906, %v1038
    %v1103 = vmul.f32 %v908, %v1039
    %v1104 = vmul.f32 %v910, %v1040
    %v1105 = vmul.f32 %v912, %v1041
    %v1106 = vmul.f32 %v914, %v1042
    %v1107 = vadd.f32 %v1043, 1.4214138
    %v1108 = vadd.f32 %v1044, 1.4214138
    %v1109 = vadd.f32 %v1045, 1.4214138
    %v1110 = vadd.f32 %v1046, 1.4214138
    %v1111 = vadd.f32 %v1047, 1.4214138
    %v1112 = vadd.f32 %v1048, 1.4214138
    %v1113 = vadd.f32 %v1049, 1.4214138
    %v1114 = vadd.f32 %v1050, 1.4214138
    %v1115 = vadd.f32 %v1051, 1.4214138
    %v1116 = vadd.f32 %v1052, 1.4214138
    %v1117 = vadd.f32 %v1053, 1.4214138
    %v1118 = vadd.f32 %v1054, 1.4214138
    %v1119 = vadd.f32 %v1055, 1.4214138
    %v1120 = vadd.f32 %v1056, 1.4214138
    %v1121 = vadd.f32 %v1057, 1.4214138
    %v1122 = vadd.f32 %v1058, 1.4214138
    %v1123 = vadd.f32 %v1059, 1.4214138
    %v1124 = vadd.f32 %v1060, 1.4214138
    %v1125 = vadd.f32 %v1061, 1.4214138
    %v1126 = vadd.f32 %v1062, 1.4214138
    %v1127 = vadd.f32 %v1063, 1.4214138
    %v1128 = vadd.f32 %v1064, 1.4214138
    %v1129 = vadd.f32 %v1065, 1.4214138
    %v1130 = vadd.f32 %v1066, 1.4214138
    %v1131 = vadd.f32 %v1067, 1.4214138
    %v1132 = vadd.f32 %v1068, 1.4214138
    %v1133 = vadd.f32 %v1069, 1.4214138
    %v1134 = vadd.f32 %v1070, 1.4214138
    %v1135 = vadd.f32 %v1071, 1.4214138
    %v1136 = vadd.f32 %v1072, 1.4214138
    %v1137 = vadd.f32 %v1073, 1.4214138
    %v1138 = vadd.f32 %v1074, 1.4214138
    %v1139 = vadd.f32 %v1075, 1.4214138
    %v1140 = vadd.f32 %v1076, 1.4214138
    %v1141 = vadd.f32 %v1077, 1.4214138
    %v1142 = vadd.f32 %v1078, 1.4214138
    %v1143 = vadd.f32 %v1079, 1.4214138
    %v1144 = vadd.f32 %v1080, 1.4214138
    %v1145 = vadd.f32 %v1081, 1.4214138
    %v1146 = vadd.f32 %v1082, 1.4214138
    %v1147 = vadd.f32 %v1083, 1.4214138
    %v1148 = vadd.f32 %v1084, 1.4214138
    %v1149 = vadd.f32 %v1085, 1.4214138
    %v1150 = vadd.f32 %v1086, 1.4214138
    %v1151 = vadd.f32 %v1087, 1.4214138
    %v1152 = vadd.f32 %v1088, 1.4214138
    %v1153 = vadd.f32 %v1089, 1.4214138
    %v1154 = vadd.f32 %v1090, 1.4214138
    %v1155 = vadd.f32 %v1091, 1.4214138
    %v1156 = vadd.f32 %v1092, 1.4214138
    %v1157 = vadd.f32 %v1093, 1.4214138
    %v1158 = vadd.f32 %v1094, 1.4214138
    %v1159 = vadd.f32 %v1095, 1.4214138
    %v1160 = vadd.f32 %v1096, 1.4214138
    %v1161 = vadd.f32 %v1097, 1.4214138
    %v1162 = vadd.f32 %v1098, 1.4214138
    %v1163 = vadd.f32 %v1099, 1.4214138
    %v1164 = vadd.f32 %v1100, 1.4214138
    %v1165 = vadd.f32 %v1101, 1.4214138
    %v1166 = vadd.f32 %v1102, 1.4214138
    %v1167 = vadd.f32 %v1103, 1.4214138
    %v1168 = vadd.f32 %v1104, 1.4214138
    %v1169 = vadd.f32 %v1105, 1.4214138
    %v1170 = vadd.f32 %v1106, 1.4214138
    %v1171 = vmul.f32 %v788, %v1107
    %v1172 = vmul.f32 %v790, %v1108
    %v1173 = vmul.f32 %v792, %v1109
    %v1174 = vmul.f32 %v794, %v1110
    %v1175 = vmul.f32 %v796, %v1111
    %v1176 = vmul.f32 %v798, %v1112
    %v1177 = vmul.f32 %v800, %v1113
    %v1178 = vmul.f32 %v802, %v1114
    %v1179 = vmul.f32 %v804, %v1115
    %v1180 = vmul.f32 %v806, %v1116
    %v1181 = vmul.f32 %v808, %v1117
    %v1182 = vmul.f32 %v810, %v1118
    %v1183 = vmul.f32 %v812, %v1119
    %v1184 = vmul.f32 %v814, %v1120
    %v1185 = vmul.f32 %v816, %v1121
    %v1186 = vmul.f32 %v818, %v1122
    %v1187 = vmul.f32 %v820, %v1123
    %v1188 = vmul.f32 %v822, %v1124
    %v1189 = vmul.f32 %v824, %v1125
    %v1190 = vmul.f32 %v826, %v1126
    %v1191 = vmul.f32 %v828, %v1127
    %v1192 = vmul.f32 %v830, %v1128
    %v1193 = vmul.f32 %v832, %v1129
    %v1194 = vmul.f32 %v834, %v1130
    %v1195 = vmul.f32 %v836, %v1131
    %v1196 = vmul.f32 %v838, %v1132
    %v1197 = vmul.f32 %v840, %v1133
    %v1198 = vmul.f32 %v842, %v1134
    %v1199 = vmul.f32 %v844, %v1135
    %v1200 = vmul.f32 %v846, %v1136
    %v1201 = vmul.f32 %v848, %v1137
    %v1202 = vmul.f32 %v850, %v1138
    %v1203 = vmul.f32 %v852, %v1139
    %v1204 = vmul.f32 %v854, %v1140
    %v1205 = vmul.f32 %v856, %v1141
    %v1206 = vmul.f32 %v858, %v1142
    %v1207 = vmul.f32 %v860, %v1143
    %v1208 = vmul.f32 %v862, %v1144
    %v1209 = vmul.f32 %v864, %v1145
    %v1210 = vmul.f32 %v866, %v1146
    %v1211 = vmul.f32 %v868, %v1147
    %v1212 = vmul.f32 %v870, %v1148
    %v1213 = vmul.f32 %v872, %v1149
    %v1214 = vmul.f32 %v874, %v1150
    %v1215 = vmul.f32 %v876, %v1151
    %v1216 = vmul.f32 %v878, %v1152
    %v1217 = vmul.f32 %v880, %v1153
    %v1218 = vmul.f32 %v882, %v1154
    %v1219 = vmul.f32 %v884, %v1155
    %v1220 = vmul.f32 %v886, %v1156
    %v1221 = vmul.f32 %v888, %v1157
    %v1222 = vmul.f32 %v890, %v1158
    %v1223 = vmul.f32 %v892, %v1159
    %v1224 = vmul.f32 %v894, %v1160
    %v1225 = vmul.f32 %v896, %v1161
    %v1226 = vmul.f32 %v898, %v1162
    %v1227 = vmul.f32 %v900, %v1163
    %v1228 = vmul.f32 %v902, %v1164
    %v1229 = vmul.f32 %v904, %v1165
    %v1230 = vmul.f32 %v906, %v1166
    %v1231 = vmul.f32 %v908, %v1167
    %v1232 = vmul.f32 %v910, %v1168
    %v1233 = vmul.f32 %v912, %v1169
    %v1234 = vmul.f32 %v914, %v1170
    %v1235 = vadd.f32 %v1171, -0.28449672
    %v1236 = vadd.f32 %v1172, -0.28449672
    %v1237 = vadd.f32 %v1173, -0.28449672
    %v1238 = vadd.f32 %v1174, -0.28449672
    %v1239 = vadd.f32 %v1175, -0.28449672
    %v1240 = vadd.f32 %v1176, -0.28449672
    %v1241 = vadd.f32 %v1177, -0.28449672
    %v1242 = vadd.f32 %v1178, -0.28449672
    %v1243 = vadd.f32 %v1179, -0.28449672
    %v1244 = vadd.f32 %v1180, -0.28449672
    %v1245 = vadd.f32 %v1181, -0.28449672
    %v1246 = vadd.f32 %v1182, -0.28449672
    %v1247 = vadd.f32 %v1183, -0.28449672
    %v1248 = vadd.f32 %v1184, -0.28449672
    %v1249 = vadd.f32 %v1185, -0.28449672
    %v1250 = vadd.f32 %v1186, -0.28449672
    %v1251 = vadd.f32 %v1187, -0.28449672
    %v1252 = vadd.f32 %v1188, -0.28449672
    %v1253 = vadd.f32 %v1189, -0.28449672
    %v1254 = vadd.f32 %v1190, -0.28449672
    %v1255 = vadd.f32 %v1191, -0.28449672
    %v1256 = vadd.f32 %v1192, -0.28449672
    %v1257 = vadd.f32 %v1193, -0.28449672
    %v1258 = vadd.f32 %v1194, -0.28449672
    %v1259 = vadd.f32 %v1195, -0.28449672
    %v1260 = vadd.f32 %v1196, -0.28449672
    %v1261 = vadd.f32 %v1197, -0.28449672
    %v1262 = vadd.f32 %v1198, -0.28449672
    %v1263 = vadd.f32 %v1199, -0.28449672
    %v1264 = vadd.f32 %v1200, -0.28449672
    %v1265 = vadd.f32 %v1201, -0.28449672
    %v1266 = vadd.f32 %v1202, -0.28449672
    %v1267 = vadd.f32 %v1203, -0.28449672
    %v1268 = vadd.f32 %v1204, -0.28449672
    %v1269 = vadd.f32 %v1205, -0.28449672
    %v1270 = vadd.f32 %v1206, -0.28449672
    %v1271 = vadd.f32 %v1207, -0.28449672
    %v1272 = vadd.f32 %v1208, -0.28449672
    %v1273 = vadd.f32 %v1209, -0.28449672
    %v1274 = vadd.f32 %v1210, -0.28449672
    %v1275 = vadd.f32 %v1211, -0.28449672
    %v1276 = vadd.f32 %v1212, -0.28449672
    %v1277 = vadd.f32 %v1213, -0.28449672
    %v1278 = vadd.f32 %v1214, -0.28449672
    %v1279 = vadd.f32 %v1215, -0.28449672
    %v1280 = vadd.f32 %v1216, -0.28449672
    %v1281 = vadd.f32 %v1217, -0.28449672
    %v1282 = vadd.f32 %v1218, -0.28449672
    %v1283 = vadd.f32 %v1219, -0.28449672
    %v1284 = vadd.f32 %v1220, -0.28449672
    %v1285 = vadd.f32 %v1221, -0.28449672
    %v1286 = vadd.f32 %v1222, -0.28449672
    %v1287 = vadd.f32 %v1223, -0.28449672
    %v1288 = vadd.f32 %v1224, -0.28449672
    %v1289 = vadd.f32 %v1225, -0.28449672
    %v1290 = vadd.f32 %v1226, -0.28449672
    %v1291 = vadd.f32 %v1227, -0.28449672
    %v1292 = vadd.f32 %v1228, -0.28449672
    %v1293 = vadd.f32 %v1229, -0.28449672
    %v1294 = vadd.f32 %v1230, -0.28449672
    %v1295 = vadd.f32 %v1231, -0.28449672
    %v1296 = vadd.f32 %v1232, -0.28449672
    %v1297 = vadd.f32 %v1233, -0.28449672
    %v1298 = vadd.f32 %v1234, -0.28449672
    %v1299 = vmul.f32 %v788, %v1235
    %v1300 = vmul.f32 %v790, %v1236
    %v1301 = vmul.f32 %v792, %v1237
    %v1302 = vmul.f32 %v794, %v1238
    %v1303 = vmul.f32 %v796, %v1239
    %v1304 = vmul.f32 %v798, %v1240
    %v1305 = vmul.f32 %v800, %v1241
    %v1306 = vmul.f32 %v802, %v1242
    %v1307 = vmul.f32 %v804, %v1243
    %v1308 = vmul.f32 %v806, %v1244
    %v1309 = vmul.f32 %v808, %v1245
    %v1310 = vmul.f32 %v810, %v1246
    %v1311 = vmul.f32 %v812, %v1247
    %v1312 = vmul.f32 %v814, %v1248
    %v1313 = vmul.f32 %v816, %v1249
    %v1314 = vmul.f32 %v818, %v1250
    %v1315 = vmul.f32 %v820, %v1251
    %v1316 = vmul.f32 %v822, %v1252
    %v1317 = vmul.f32 %v824, %v1253
    %v1318 = vmul.f32 %v826, %v1254
    %v1319 = vmul.f32 %v828, %v1255
    %v1320 = vmul.f32 %v830, %v1256
    %v1321 = vmul.f32 %v832, %v1257
    %v1322 = vmul.f32 %v834, %v1258
    %v1323 = vmul.f32 %v836, %v1259
    %v1324 = vmul.f32 %v838, %v1260
    %v1325 = vmul.f32 %v840, %v1261
    %v1326 = vmul.f32 %v842, %v1262
    %v1327 = vmul.f32 %v844, %v1263
    %v1328 = vmul.f32 %v846, %v1264
    %v1329 = vmul.f32 %v848, %v1265
    %v1330 = vmul.f32 %v850, %v1266
    %v1331 = vmul.f32 %v852, %v1267
    %v1332 = vmul.f32 %v854, %v1268
    %v1333 = vmul.f32 %v856, %v1269
    %v1334 = vmul.f32 %v858, %v1270
    %v1335 = vmul.f32 %v860, %v1271
    %v1336 = vmul.f32 %v862, %v1272
    %v1337 = vmul.f32 %v864, %v1273
    %v1338 = vmul.f32 %v866, %v1274
    %v1339 = vmul.f32 %v868, %v1275
    %v1340 = vmul.f32 %v870, %v1276
    %v1341 = vmul.f32 %v872, %v1277
    %v1342 = vmul.f32 %v874, %v1278
    %v1343 = vmul.f32 %v876, %v1279
    %v1344 = vmul.f32 %v878, %v1280
    %v1345 = vmul.f32 %v880, %v1281
    %v1346 = vmul.f32 %v882, %v1282
    %v1347 = vmul.f32 %v884, %v1283
    %v1348 = vmul.f32 %v886, %v1284
    %v1349 = vmul.f32 %v888, %v1285
    %v1350 = vmul.f32 %v890, %v1286
    %v1351 = vmul.f32 %v892, %v1287
    %v1352 = vmul.f32 %v894, %v1288
    %v1353 = vmul.f32 %v896, %v1289
    %v1354 = vmul.f32 %v898, %v1290
    %v1355 = vmul.f32 %v900, %v1291
    %v1356 = vmul.f32 %v902, %v1292
    %v1357 = vmul.f32 %v904, %v1293
    %v1358 = vmul.f32 %v906, %v1294
    %v1359 = vmul.f32 %v908, %v1295
    %v1360 = vmul.f32 %v910, %v1296
    %v1361 = vmul.f32 %v912, %v1297
    %v1362 = vmul.f32 %v914, %v1298
    %v1363 = vadd.f32 %v1299, 0.2548296
    %v1364 = vadd.f32 %v1300, 0.2548296
    %v1365 = vadd.f32 %v1301, 0.2548296
    %v1366 = vadd.f32 %v1302, 0.2548296
    %v1367 = vadd.f32 %v1303, 0.2548296
    %v1368 = vadd.f32 %v1304, 0.2548296
    %v1369 = vadd.f32 %v1305, 0.2548296
    %v1370 = vadd.f32 %v1306, 0.2548296
    %v1371 = vadd.f32 %v1307, 0.2548296
    %v1372 = vadd.f32 %v1308, 0.2548296
    %v1373 = vadd.f32 %v1309, 0.2548296
    %v1374 = vadd.f32 %v1310, 0.2548296
    %v1375 = vadd.f32 %v1311, 0.2548296
    %v1376 = vadd.f32 %v1312, 0.2548296
    %v1377 = vadd.f32 %v1313, 0.2548296
    %v1378 = vadd.f32 %v1314, 0.2548296
    %v1379 = vadd.f32 %v1315, 0.2548296
    %v1380 = vadd.f32 %v1316, 0.2548296
    %v1381 = vadd.f32 %v1317, 0.2548296
    %v1382 = vadd.f32 %v1318, 0.2548296
    %v1383 = vadd.f32 %v1319, 0.2548296
    %v1384 = vadd.f32 %v1320, 0.2548296
    %v1385 = vadd.f32 %v1321, 0.2548296
    %v1386 = vadd.f32 %v1322, 0.2548296
    %v1387 = vadd.f32 %v1323, 0.2548296
    %v1388 = vadd.f32 %v1324, 0.2548296
    %v1389 = vadd.f32 %v1325, 0.2548296
    %v1390 = vadd.f32 %v1326, 0.2548296
    %v1391 = vadd.f32 %v1327, 0.2548296
    %v1392 = vadd.f32 %v1328, 0.2548296
    %v1393 = vadd.f32 %v1329, 0.2548296
    %v1394 = vadd.f32 %v1330, 0.2548296
    %v1395 = vadd.f32 %v1331, 0.2548296
    %v1396 = vadd.f32 %v1332, 0.2548296
    %v1397 = vadd.f32 %v1333, 0.2548296
    %v1398 = vadd.f32 %v1334, 0.2548296
    %v1399 = vadd.f32 %v1335, 0.2548296
    %v1400 = vadd.f32 %v1336, 0.2548296
    %v1401 = vadd.f32 %v1337, 0.2548296
    %v1402 = vadd.f32 %v1338, 0.2548296
    %v1403 = vadd.f32 %v1339, 0.2548296
    %v1404 = vadd.f32 %v1340, 0.2548296
    %v1405 = vadd.f32 %v1341, 0.2548296
    %v1406 = vadd.f32 %v1342, 0.2548296
    %v1407 = vadd.f32 %v1343, 0.2548296
    %v1408 = vadd.f32 %v1344, 0.2548296
    %v1409 = vadd.f32 %v1345, 0.2548296
    %v1410 = vadd.f32 %v1346, 0.2548296
    %v1411 = vadd.f32 %v1347, 0.2548296
    %v1412 = vadd.f32 %v1348, 0.2548296
    %v1413 = vadd.f32 %v1349, 0.2548296
    %v1414 = vadd.f32 %v1350, 0.2548296
    %v1415 = vadd.f32 %v1351, 0.2548296
    %v1416 = vadd.f32 %v1352, 0.2548296
    %v1417 = vadd.f32 %v1353, 0.2548296
    %v1418 = vadd.f32 %v1354, 0.2548296
    %v1419 = vadd.f32 %v1355, 0.2548296
    %v1420 = vadd.f32 %v1356, 0.2548296
    %v1421 = vadd.f32 %v1357, 0.2548296
    %v1422 = vadd.f32 %v1358, 0.2548296
    %v1423 = vadd.f32 %v1359, 0.2548296
    %v1424 = vadd.f32 %v1360, 0.2548296
    %v1425 = vadd.f32 %v1361, 0.2548296
    %v1426 = vadd.f32 %v1362, 0.2548296
    %v1427 = vmul.f32 %v788, %v1363
    %v1428 = vmul.f32 %v790, %v1364
    %v1429 = vmul.f32 %v792, %v1365
    %v1430 = vmul.f32 %v794, %v1366
    %v1431 = vmul.f32 %v796, %v1367
    %v1432 = vmul.f32 %v798, %v1368
    %v1433 = vmul.f32 %v800, %v1369
    %v1434 = vmul.f32 %v802, %v1370
    %v1435 = vmul.f32 %v804, %v1371
    %v1436 = vmul.f32 %v806, %v1372
    %v1437 = vmul.f32 %v808, %v1373
    %v1438 = vmul.f32 %v810, %v1374
    %v1439 = vmul.f32 %v812, %v1375
    %v1440 = vmul.f32 %v814, %v1376
    %v1441 = vmul.f32 %v816, %v1377
    %v1442 = vmul.f32 %v818, %v1378
    %v1443 = vmul.f32 %v820, %v1379
    %v1444 = vmul.f32 %v822, %v1380
    %v1445 = vmul.f32 %v824, %v1381
    %v1446 = vmul.f32 %v826, %v1382
    %v1447 = vmul.f32 %v828, %v1383
    %v1448 = vmul.f32 %v830, %v1384
    %v1449 = vmul.f32 %v832, %v1385
    %v1450 = vmul.f32 %v834, %v1386
    %v1451 = vmul.f32 %v836, %v1387
    %v1452 = vmul.f32 %v838, %v1388
    %v1453 = vmul.f32 %v840, %v1389
    %v1454 = vmul.f32 %v842, %v1390
    %v1455 = vmul.f32 %v844, %v1391
    %v1456 = vmul.f32 %v846, %v1392
    %v1457 = vmul.f32 %v848, %v1393
    %v1458 = vmul.f32 %v850, %v1394
    %v1459 = vmul.f32 %v852, %v1395
    %v1460 = vmul.f32 %v854, %v1396
    %v1461 = vmul.f32 %v856, %v1397
    %v1462 = vmul.f32 %v858, %v1398
    %v1463 = vmul.f32 %v860, %v1399
    %v1464 = vmul.f32 %v862, %v1400
    %v1465 = vmul.f32 %v864, %v1401
    %v1466 = vmul.f32 %v866, %v1402
    %v1467 = vmul.f32 %v868, %v1403
    %v1468 = vmul.f32 %v870, %v1404
    %v1469 = vmul.f32 %v872, %v1405
    %v1470 = vmul.f32 %v874, %v1406
    %v1471 = vmul.f32 %v876, %v1407
    %v1472 = vmul.f32 %v878, %v1408
    %v1473 = vmul.f32 %v880, %v1409
    %v1474 = vmul.f32 %v882, %v1410
    %v1475 = vmul.f32 %v884, %v1411
    %v1476 = vmul.f32 %v886, %v1412
    %v1477 = vmul.f32 %v888, %v1413
    %v1478 = vmul.f32 %v890, %v1414
    %v1479 = vmul.f32 %v892, %v1415
    %v1480 = vmul.f32 %v894, %v1416
    %v1481 = vmul.f32 %v896, %v1417
    %v1482 = vmul.f32 %v898, %v1418
    %v1483 = vmul.f32 %v900, %v1419
    %v1484 = vmul.f32 %v902, %v1420
    %v1485 = vmul.f32 %v904, %v1421
    %v1486 = vmul.f32 %v906, %v1422
    %v1487 = vmul.f32 %v908, %v1423
    %v1488 = vmul.f32 %v910, %v1424
    %v1489 = vmul.f32 %v912, %v1425
    %v1490 = vmul.f32 %v914, %v1426
    %v1491 = vsub.f32 0.0, %v595
    %v1492 = vsub.f32 0.0, %v596
    %v1493 = vsub.f32 0.0, %v597
    %v1494 = vsub.f32 0.0, %v598
    %v1495 = vsub.f32 0.0, %v599
    %v1496 = vsub.f32 0.0, %v600
    %v1497 = vsub.f32 0.0, %v601
    %v1498 = vsub.f32 0.0, %v602
    %v1499 = vsub.f32 0.0, %v603
    %v1500 = vsub.f32 0.0, %v604
    %v1501 = vsub.f32 0.0, %v605
    %v1502 = vsub.f32 0.0, %v606
    %v1503 = vsub.f32 0.0, %v607
    %v1504 = vsub.f32 0.0, %v608
    %v1505 = vsub.f32 0.0, %v609
    %v1506 = vsub.f32 0.0, %v610
    %v1507 = vsub.f32 0.0, %v611
    %v1508 = vsub.f32 0.0, %v612
    %v1509 = vsub.f32 0.0, %v613
    %v1510 = vsub.f32 0.0, %v614
    %v1511 = vsub.f32 0.0, %v615
    %v1512 = vsub.f32 0.0, %v616
    %v1513 = vsub.f32 0.0, %v617
    %v1514 = vsub.f32 0.0, %v618
    %v1515 = vsub.f32 0.0, %v619
    %v1516 = vsub.f32 0.0, %v620
    %v1517 = vsub.f32 0.0, %v621
    %v1518 = vsub.f32 0.0, %v622
    %v1519 = vsub.f32 0.0, %v623
    %v1520 = vsub.f32 0.0, %v624
    %v1521 = vsub.f32 0.0, %v625
    %v1522 = vsub.f32 0.0, %v626
    %v1523 = vsub.f32 0.0, %v627
    %v1524 = vsub.f32 0.0, %v628
    %v1525 = vsub.f32 0.0, %v629
    %v1526 = vsub.f32 0.0, %v630
    %v1527 = vsub.f32 0.0, %v631
    %v1528 = vsub.f32 0.0, %v632
    %v1529 = vsub.f32 0.0, %v633
    %v1530 = vsub.f32 0.0, %v634
    %v1531 = vsub.f32 0.0, %v635
    %v1532 = vsub.f32 0.0, %v636
    %v1533 = vsub.f32 0.0, %v637
    %v1534 = vsub.f32 0.0, %v638
    %v1535 = vsub.f32 0.0, %v639
    %v1536 = vsub.f32 0.0, %v640
    %v1537 = vsub.f32 0.0, %v641
    %v1538 = vsub.f32 0.0, %v642
    %v1539 = vsub.f32 0.0, %v643
    %v1540 = vsub.f32 0.0, %v644
    %v1541 = vsub.f32 0.0, %v645
    %v1542 = vsub.f32 0.0, %v646
    %v1543 = vsub.f32 0.0, %v647
    %v1544 = vsub.f32 0.0, %v648
    %v1545 = vsub.f32 0.0, %v649
    %v1546 = vsub.f32 0.0, %v650
    %v1547 = vsub.f32 0.0, %v651
    %v1548 = vsub.f32 0.0, %v652
    %v1549 = vsub.f32 0.0, %v653
    %v1550 = vsub.f32 0.0, %v654
    %v1551 = vsub.f32 0.0, %v655
    %v1552 = vsub.f32 0.0, %v656
    %v1553 = vsub.f32 0.0, %v657
    %v1554 = vsub.f32 0.0, %v658
    %v1555 = vmul.f32 %v1491, %v595
    %v1556 = vmul.f32 %v1492, %v596
    %v1557 = vmul.f32 %v1493, %v597
    %v1558 = vmul.f32 %v1494, %v598
    %v1559 = vmul.f32 %v1495, %v599
    %v1560 = vmul.f32 %v1496, %v600
    %v1561 = vmul.f32 %v1497, %v601
    %v1562 = vmul.f32 %v1498, %v602
    %v1563 = vmul.f32 %v1499, %v603
    %v1564 = vmul.f32 %v1500, %v604
    %v1565 = vmul.f32 %v1501, %v605
    %v1566 = vmul.f32 %v1502, %v606
    %v1567 = vmul.f32 %v1503, %v607
    %v1568 = vmul.f32 %v1504, %v608
    %v1569 = vmul.f32 %v1505, %v609
    %v1570 = vmul.f32 %v1506, %v610
    %v1571 = vmul.f32 %v1507, %v611
    %v1572 = vmul.f32 %v1508, %v612
    %v1573 = vmul.f32 %v1509, %v613
    %v1574 = vmul.f32 %v1510, %v614
    %v1575 = vmul.f32 %v1511, %v615
    %v1576 = vmul.f32 %v1512, %v616
    %v1577 = vmul.f32 %v1513, %v617
    %v1578 = vmul.f32 %v1514, %v618
    %v1579 = vmul.f32 %v1515, %v619
    %v1580 = vmul.f32 %v1516, %v620
    %v1581 = vmul.f32 %v1517, %v621
    %v1582 = vmul.f32 %v1518, %v622
    %v1583 = vmul.f32 %v1519, %v623
    %v1584 = vmul.f32 %v1520, %v624
    %v1585 = vmul.f32 %v1521, %v625
    %v1586 = vmul.f32 %v1522, %v626
    %v1587 = vmul.f32 %v1523, %v627
    %v1588 = vmul.f32 %v1524, %v628
    %v1589 = vmul.f32 %v1525, %v629
    %v1590 = vmul.f32 %v1526, %v630
    %v1591 = vmul.f32 %v1527, %v631
    %v1592 = vmul.f32 %v1528, %v632
    %v1593 = vmul.f32 %v1529, %v633
    %v1594 = vmul.f32 %v1530, %v634
    %v1595 = vmul.f32 %v1531, %v635
    %v1596 = vmul.f32 %v1532, %v636
    %v1597 = vmul.f32 %v1533, %v637
    %v1598 = vmul.f32 %v1534, %v638
    %v1599 = vmul.f32 %v1535, %v639
    %v1600 = vmul.f32 %v1536, %v640
    %v1601 = vmul.f32 %v1537, %v641
    %v1602 = vmul.f32 %v1538, %v642
    %v1603 = vmul.f32 %v1539, %v643
    %v1604 = vmul.f32 %v1540, %v644
    %v1605 = vmul.f32 %v1541, %v645
    %v1606 = vmul.f32 %v1542, %v646
    %v1607 = vmul.f32 %v1543, %v647
    %v1608 = vmul.f32 %v1544, %v648
    %v1609 = vmul.f32 %v1545, %v649
    %v1610 = vmul.f32 %v1546, %v650
    %v1611 = vmul.f32 %v1547, %v651
    %v1612 = vmul.f32 %v1548, %v652
    %v1613 = vmul.f32 %v1549, %v653
    %v1614 = vmul.f32 %v1550, %v654
    %v1615 = vmul.f32 %v1551, %v655
    %v1616 = vmul.f32 %v1552, %v656
    %v1617 = vmul.f32 %v1553, %v657
    %v1618 = vmul.f32 %v1554, %v658
    %v1619 = vmul.f32 %v1555, 1.442695
    %v1620 = vpow.pop %v1619
    %v1621 = vmul.f32 %v1556, 1.442695
    %v1622 = vpow.pop %v1621
    %v1623 = vmul.f32 %v1557, 1.442695
    %v1624 = vpow.pop %v1623
    %v1625 = vmul.f32 %v1558, 1.442695
    %v1626 = vpow.pop %v1625
    %v1627 = vmul.f32 %v1559, 1.442695
    %v1628 = vpow.pop %v1627
    %v1629 = vmul.f32 %v1560, 1.442695
    %v1630 = vpow.pop %v1629
    %v1631 = vmul.f32 %v1561, 1.442695
    %v1632 = vpow.pop %v1631
    %v1633 = vmul.f32 %v1562, 1.442695
    %v1634 = vpow.pop %v1633
    %v1635 = vmul.f32 %v1563, 1.442695
    %v1636 = vpow.pop %v1635
    %v1637 = vmul.f32 %v1564, 1.442695
    %v1638 = vpow.pop %v1637
    %v1639 = vmul.f32 %v1565, 1.442695
    %v1640 = vpow.pop %v1639
    %v1641 = vmul.f32 %v1566, 1.442695
    %v1642 = vpow.pop %v1641
    %v1643 = vmul.f32 %v1567, 1.442695
    %v1644 = vpow.pop %v1643
    %v1645 = vmul.f32 %v1568, 1.442695
    %v1646 = vpow.pop %v1645
    %v1647 = vmul.f32 %v1569, 1.442695
    %v1648 = vpow.pop %v1647
    %v1649 = vmul.f32 %v1570, 1.442695
    %v1650 = vpow.pop %v1649
    %v1651 = vmul.f32 %v1571, 1.442695
    %v1652 = vpow.pop %v1651
    %v1653 = vmul.f32 %v1572, 1.442695
    %v1654 = vpow.pop %v1653
    %v1655 = vmul.f32 %v1573, 1.442695
    %v1656 = vpow.pop %v1655
    %v1657 = vmul.f32 %v1574, 1.442695
    %v1658 = vpow.pop %v1657
    %v1659 = vmul.f32 %v1575, 1.442695
    %v1660 = vpow.pop %v1659
    %v1661 = vmul.f32 %v1576, 1.442695
    %v1662 = vpow.pop %v1661
    %v1663 = vmul.f32 %v1577, 1.442695
    %v1664 = vpow.pop %v1663
    %v1665 = vmul.f32 %v1578, 1.442695
    %v1666 = vpow.pop %v1665
    %v1667 = vmul.f32 %v1579, 1.442695
    %v1668 = vpow.pop %v1667
    %v1669 = vmul.f32 %v1580, 1.442695
    %v1670 = vpow.pop %v1669
    %v1671 = vmul.f32 %v1581, 1.442695
    %v1672 = vpow.pop %v1671
    %v1673 = vmul.f32 %v1582, 1.442695
    %v1674 = vpow.pop %v1673
    %v1675 = vmul.f32 %v1583, 1.442695
    %v1676 = vpow.pop %v1675
    %v1677 = vmul.f32 %v1584, 1.442695
    %v1678 = vpow.pop %v1677
    %v1679 = vmul.f32 %v1585, 1.442695
    %v1680 = vpow.pop %v1679
    %v1681 = vmul.f32 %v1586, 1.442695
    %v1682 = vpow.pop %v1681
    %v1683 = vmul.f32 %v1587, 1.442695
    %v1684 = vpow.pop %v1683
    %v1685 = vmul.f32 %v1588, 1.442695
    %v1686 = vpow.pop %v1685
    %v1687 = vmul.f32 %v1589, 1.442695
    %v1688 = vpow.pop %v1687
    %v1689 = vmul.f32 %v1590, 1.442695
    %v1690 = vpow.pop %v1689
    %v1691 = vmul.f32 %v1591, 1.442695
    %v1692 = vpow.pop %v1691
    %v1693 = vmul.f32 %v1592, 1.442695
    %v1694 = vpow.pop %v1693
    %v1695 = vmul.f32 %v1593, 1.442695
    %v1696 = vpow.pop %v1695
    %v1697 = vmul.f32 %v1594, 1.442695
    %v1698 = vpow.pop %v1697
    %v1699 = vmul.f32 %v1595, 1.442695
    %v1700 = vpow.pop %v1699
    %v1701 = vmul.f32 %v1596, 1.442695
    %v1702 = vpow.pop %v1701
    %v1703 = vmul.f32 %v1597, 1.442695
    %v1704 = vpow.pop %v1703
    %v1705 = vmul.f32 %v1598, 1.442695
    %v1706 = vpow.pop %v1705
    %v1707 = vmul.f32 %v1599, 1.442695
    %v1708 = vpow.pop %v1707
    %v1709 = vmul.f32 %v1600, 1.442695
    %v1710 = vpow.pop %v1709
    %v1711 = vmul.f32 %v1601, 1.442695
    %v1712 = vpow.pop %v1711
    %v1713 = vmul.f32 %v1602, 1.442695
    %v1714 = vpow.pop %v1713
    %v1715 = vmul.f32 %v1603, 1.442695
    %v1716 = vpow.pop %v1715
    %v1717 = vmul.f32 %v1604, 1.442695
    %v1718 = vpow.pop %v1717
    %v1719 = vmul.f32 %v1605, 1.442695
    %v1720 = vpow.pop %v1719
    %v1721 = vmul.f32 %v1606, 1.442695
    %v1722 = vpow.pop %v1721
    %v1723 = vmul.f32 %v1607, 1.442695
    %v1724 = vpow.pop %v1723
    %v1725 = vmul.f32 %v1608, 1.442695
    %v1726 = vpow.pop %v1725
    %v1727 = vmul.f32 %v1609, 1.442695
    %v1728 = vpow.pop %v1727
    %v1729 = vmul.f32 %v1610, 1.442695
    %v1730 = vpow.pop %v1729
    %v1731 = vmul.f32 %v1611, 1.442695
    %v1732 = vpow.pop %v1731
    %v1733 = vmul.f32 %v1612, 1.442695
    %v1734 = vpow.pop %v1733
    %v1735 = vmul.f32 %v1613, 1.442695
    %v1736 = vpow.pop %v1735
    %v1737 = vmul.f32 %v1614, 1.442695
    %v1738 = vpow.pop %v1737
    %v1739 = vmul.f32 %v1615, 1.442695
    %v1740 = vpow.pop %v1739
    %v1741 = vmul.f32 %v1616, 1.442695
    %v1742 = vpow.pop %v1741
    %v1743 = vmul.f32 %v1617, 1.442695
    %v1744 = vpow.pop %v1743
    %v1745 = vmul.f32 %v1618, 1.442695
    %v1746 = vpow.pop %v1745
    %v1747 = vmul.f32 %v1427, %v1620
    %v1748 = vmul.f32 %v1428, %v1622
    %v1749 = vmul.f32 %v1429, %v1624
    %v1750 = vmul.f32 %v1430, %v1626
    %v1751 = vmul.f32 %v1431, %v1628
    %v1752 = vmul.f32 %v1432, %v1630
    %v1753 = vmul.f32 %v1433, %v1632
    %v1754 = vmul.f32 %v1434, %v1634
    %v1755 = vmul.f32 %v1435, %v1636
    %v1756 = vmul.f32 %v1436, %v1638
    %v1757 = vmul.f32 %v1437, %v1640
    %v1758 = vmul.f32 %v1438, %v1642
    %v1759 = vmul.f32 %v1439, %v1644
    %v1760 = vmul.f32 %v1440, %v1646
    %v1761 = vmul.f32 %v1441, %v1648
    %v1762 = vmul.f32 %v1442, %v1650
    %v1763 = vmul.f32 %v1443, %v1652
    %v1764 = vmul.f32 %v1444, %v1654
    %v1765 = vmul.f32 %v1445, %v1656
    %v1766 = vmul.f32 %v1446, %v1658
    %v1767 = vmul.f32 %v1447, %v1660
    %v1768 = vmul.f32 %v1448, %v1662
    %v1769 = vmul.f32 %v1449, %v1664
    %v1770 = vmul.f32 %v1450, %v1666
    %v1771 = vmul.f32 %v1451, %v1668
    %v1772 = vmul.f32 %v1452, %v1670
    %v1773 = vmul.f32 %v1453, %v1672
    %v1774 = vmul.f32 %v1454, %v1674
    %v1775 = vmul.f32 %v1455, %v1676
    %v1776 = vmul.f32 %v1456, %v1678
    %v1777 = vmul.f32 %v1457, %v1680
    %v1778 = vmul.f32 %v1458, %v1682
    %v1779 = vmul.f32 %v1459, %v1684
    %v1780 = vmul.f32 %v1460, %v1686
    %v1781 = vmul.f32 %v1461, %v1688
    %v1782 = vmul.f32 %v1462, %v1690
    %v1783 = vmul.f32 %v1463, %v1692
    %v1784 = vmul.f32 %v1464, %v1694
    %v1785 = vmul.f32 %v1465, %v1696
    %v1786 = vmul.f32 %v1466, %v1698
    %v1787 = vmul.f32 %v1467, %v1700
    %v1788 = vmul.f32 %v1468, %v1702
    %v1789 = vmul.f32 %v1469, %v1704
    %v1790 = vmul.f32 %v1470, %v1706
    %v1791 = vmul.f32 %v1471, %v1708
    %v1792 = vmul.f32 %v1472, %v1710
    %v1793 = vmul.f32 %v1473, %v1712
    %v1794 = vmul.f32 %v1474, %v1714
    %v1795 = vmul.f32 %v1475, %v1716
    %v1796 = vmul.f32 %v1476, %v1718
    %v1797 = vmul.f32 %v1477, %v1720
    %v1798 = vmul.f32 %v1478, %v1722
    %v1799 = vmul.f32 %v1479, %v1724
    %v1800 = vmul.f32 %v1480, %v1726
    %v1801 = vmul.f32 %v1481, %v1728
    %v1802 = vmul.f32 %v1482, %v1730
    %v1803 = vmul.f32 %v1483, %v1732
    %v1804 = vmul.f32 %v1484, %v1734
    %v1805 = vmul.f32 %v1485, %v1736
    %v1806 = vmul.f32 %v1486, %v1738
    %v1807 = vmul.f32 %v1487, %v1740
    %v1808 = vmul.f32 %v1488, %v1742
    %v1809 = vmul.f32 %v1489, %v1744
    %v1810 = vmul.f32 %v1490, %v1746
    %v1811 = vsub.f32 1.0, %v1747
    %v1812 = vsub.f32 1.0, %v1748
    %v1813 = vsub.f32 1.0, %v1749
    %v1814 = vsub.f32 1.0, %v1750
    %v1815 = vsub.f32 1.0, %v1751
    %v1816 = vsub.f32 1.0, %v1752
    %v1817 = vsub.f32 1.0, %v1753
    %v1818 = vsub.f32 1.0, %v1754
    %v1819 = vsub.f32 1.0, %v1755
    %v1820 = vsub.f32 1.0, %v1756
    %v1821 = vsub.f32 1.0, %v1757
    %v1822 = vsub.f32 1.0, %v1758
    %v1823 = vsub.f32 1.0, %v1759
    %v1824 = vsub.f32 1.0, %v1760
    %v1825 = vsub.f32 1.0, %v1761
    %v1826 = vsub.f32 1.0, %v1762
    %v1827 = vsub.f32 1.0, %v1763
    %v1828 = vsub.f32 1.0, %v1764
    %v1829 = vsub.f32 1.0, %v1765
    %v1830 = vsub.f32 1.0, %v1766
    %v1831 = vsub.f32 1.0, %v1767
    %v1832 = vsub.f32 1.0, %v1768
    %v1833 = vsub.f32 1.0, %v1769
    %v1834 = vsub.f32 1.0, %v1770
    %v1835 = vsub.f32 1.0, %v1771
    %v1836 = vsub.f32 1.0, %v1772
    %v1837 = vsub.f32 1.0, %v1773
    %v1838 = vsub.f32 1.0, %v1774
    %v1839 = vsub.f32 1.0, %v1775
    %v1840 = vsub.f32 1.0, %v1776
    %v1841 = vsub.f32 1.0, %v1777
    %v1842 = vsub.f32 1.0, %v1778
    %v1843 = vsub.f32 1.0, %v1779
    %v1844 = vsub.f32 1.0, %v1780
    %v1845 = vsub.f32 1.0, %v1781
    %v1846 = vsub.f32 1.0, %v1782
    %v1847 = vsub.f32 1.0, %v1783
    %v1848 = vsub.f32 1.0, %v1784
    %v1849 = vsub.f32 1.0, %v1785
    %v1850 = vsub.f32 1.0, %v1786
    %v1851 = vsub.f32 1.0, %v1787
    %v1852 = vsub.f32 1.0, %v1788
    %v1853 = vsub.f32 1.0, %v1789
    %v1854 = vsub.f32 1.0, %v1790
    %v1855 = vsub.f32 1.0, %v1791
    %v1856 = vsub.f32 1.0, %v1792
    %v1857 = vsub.f32 1.0, %v1793
    %v1858 = vsub.f32 1.0, %v1794
    %v1859 = vsub.f32 1.0, %v1795
    %v1860 = vsub.f32 1.0, %v1796
    %v1861 = vsub.f32 1.0, %v1797
    %v1862 = vsub.f32 1.0, %v1798
    %v1863 = vsub.f32 1.0, %v1799
    %v1864 = vsub.f32 1.0, %v1800
    %v1865 = vsub.f32 1.0, %v1801
    %v1866 = vsub.f32 1.0, %v1802
    %v1867 = vsub.f32 1.0, %v1803
    %v1868 = vsub.f32 1.0, %v1804
    %v1869 = vsub.f32 1.0, %v1805
    %v1870 = vsub.f32 1.0, %v1806
    %v1871 = vsub.f32 1.0, %v1807
    %v1872 = vsub.f32 1.0, %v1808
    %v1873 = vsub.f32 1.0, %v1809
    %v1874 = vsub.f32 1.0, %v1810
    %vm1875 = vcmp.lt.f32.partialorder %v531, 0.0
    %vm1876 = vcmp.lt.f32.partialorder %v532, 0.0
    %vm1877 = vcmp.lt.f32.partialorder %v533, 0.0
    %vm1878 = vcmp.lt.f32.partialorder %v534, 0.0
    %vm1879 = vcmp.lt.f32.partialorder %v535, 0.0
    %vm1880 = vcmp.lt.f32.partialorder %v536, 0.0
    %vm1881 = vcmp.lt.f32.partialorder %v537, 0.0
    %vm1882 = vcmp.lt.f32.partialorder %v538, 0.0
    %vm1883 = vcmp.lt.f32.partialorder %v539, 0.0
    %vm1884 = vcmp.lt.f32.partialorder %v540, 0.0
    %vm1885 = vcmp.lt.f32.partialorder %v541, 0.0
    %vm1886 = vcmp.lt.f32.partialorder %v542, 0.0
    %vm1887 = vcmp.lt.f32.partialorder %v543, 0.0
    %vm1888 = vcmp.lt.f32.partialorder %v544, 0.0
    %vm1889 = vcmp.lt.f32.partialorder %v545, 0.0
    %vm1890 = vcmp.lt.f32.partialorder %v546, 0.0
    %vm1891 = vcmp.lt.f32.partialorder %v547, 0.0
    %vm1892 = vcmp.lt.f32.partialorder %v548, 0.0
    %vm1893 = vcmp.lt.f32.partialorder %v549, 0.0
    %vm1894 = vcmp.lt.f32.partialorder %v550, 0.0
    %vm1895 = vcmp.lt.f32.partialorder %v551, 0.0
    %vm1896 = vcmp.lt.f32.partialorder %v552, 0.0
    %vm1897 = vcmp.lt.f32.partialorder %v553, 0.0
    %vm1898 = vcmp.lt.f32.partialorder %v554, 0.0
    %vm1899 = vcmp.lt.f32.partialorder %v555, 0.0
    %vm1900 = vcmp.lt.f32.partialorder %v556, 0.0
    %vm1901 = vcmp.lt.f32.partialorder %v557, 0.0
    %vm1902 = vcmp.lt.f32.partialorder %v558, 0.0
    %vm1903 = vcmp.lt.f32.partialorder %v559, 0.0
    %vm1904 = vcmp.lt.f32.partialorder %v560, 0.0
    %vm1905 = vcmp.lt.f32.partialorder %v561, 0.0
    %vm1906 = vcmp.lt.f32.partialorder %v562, 0.0
    %vm1907 = vcmp.lt.f32.partialorder %v563, 0.0
    %vm1908 = vcmp.lt.f32.partialorder %v564, 0.0
    %vm1909 = vcmp.lt.f32.partialorder %v565, 0.0
    %vm1910 = vcmp.lt.f32.partialorder %v566, 0.0
    %vm1911 = vcmp.lt.f32.partialorder %v567, 0.0
    %vm1912 = vcmp.lt.f32.partialorder %v568, 0.0
    %vm1913 = vcmp.lt.f32.partialorder %v569, 0.0
    %vm1914 = vcmp.lt.f32.partialorder %v570, 0.0
    %vm1915 = vcmp.lt.f32.partialorder %v571, 0.0
    %vm1916 = vcmp.lt.f32.partialorder %v572, 0.0
    %vm1917 = vcmp.lt.f32.partialorder %v573, 0.0
    %vm1918 = vcmp.lt.f32.partialorder %v574, 0.0
    %vm1919 = vcmp.lt.f32.partialorder %v575, 0.0
    %vm1920 = vcmp.lt.f32.partialorder %v576, 0.0
    %vm1921 = vcmp.lt.f32.partialorder %v577, 0.0
    %vm1922 = vcmp.lt.f32.partialorder %v578, 0.0
    %vm1923 = vcmp.lt.f32.partialorder %v579, 0.0
    %vm1924 = vcmp.lt.f32.partialorder %v580, 0.0
    %vm1925 = vcmp.lt.f32.partialorder %v581, 0.0
    %vm1926 = vcmp.lt.f32.partialorder %v582, 0.0
    %vm1927 = vcmp.lt.f32.partialorder %v583, 0.0
    %vm1928 = vcmp.lt.f32.partialorder %v584, 0.0
    %vm1929 = vcmp.lt.f32.partialorder %v585, 0.0
    %vm1930 = vcmp.lt.f32.partialorder %v586, 0.0
    %vm1931 = vcmp.lt.f32.partialorder %v587, 0.0
    %vm1932 = vcmp.lt.f32.partialorder %v588, 0.0
    %vm1933 = vcmp.lt.f32.partialorder %v589, 0.0
    %vm1934 = vcmp.lt.f32.partialorder %v590, 0.0
    %vm1935 = vcmp.lt.f32.partialorder %v591, 0.0
    %vm1936 = vcmp.lt.f32.partialorder %v592, 0.0
    %vm1937 = vcmp.lt.f32.partialorder %v593, 0.0
    %vm1938 = vcmp.lt.f32.partialorder %v594, 0.0
    %v1939 = vsub.f32 0.0, %v1811
    %v1940 = vsub.f32 0.0, %v1812
    %v1941 = vsub.f32 0.0, %v1813
    %v1942 = vsub.f32 0.0, %v1814
    %v1943 = vsub.f32 0.0, %v1815
    %v1944 = vsub.f32 0.0, %v1816
    %v1945 = vsub.f32 0.0, %v1817
    %v1946 = vsub.f32 0.0, %v1818
    %v1947 = vsub.f32 0.0, %v1819
    %v1948 = vsub.f32 0.0, %v1820
    %v1949 = vsub.f32 0.0, %v1821
    %v1950 = vsub.f32 0.0, %v1822
    %v1951 = vsub.f32 0.0, %v1823
    %v1952 = vsub.f32 0.0, %v1824
    %v1953 = vsub.f32 0.0, %v1825
    %v1954 = vsub.f32 0.0, %v1826
    %v1955 = vsub.f32 0.0, %v1827
    %v1956 = vsub.f32 0.0, %v1828
    %v1957 = vsub.f32 0.0, %v1829
    %v1958 = vsub.f32 0.0, %v1830
    %v1959 = vsub.f32 0.0, %v1831
    %v1960 = vsub.f32 0.0, %v1832
    %v1961 = vsub.f32 0.0, %v1833
    %v1962 = vsub.f32 0.0, %v1834
    %v1963 = vsub.f32 0.0, %v1835
    %v1964 = vsub.f32 0.0, %v1836
    %v1965 = vsub.f32 0.0, %v1837
    %v1966 = vsub.f32 0.0, %v1838
    %v1967 = vsub.f32 0.0, %v1839
    %v1968 = vsub.f32 0.0, %v1840
    %v1969 = vsub.f32 0.0, %v1841
    %v1970 = vsub.f32 0.0, %v1842
    %v1971 = vsub.f32 0.0, %v1843
    %v1972 = vsub.f32 0.0, %v1844
    %v1973 = vsub.f32 0.0, %v1845
    %v1974 = vsub.f32 0.0, %v1846
    %v1975 = vsub.f32 0.0, %v1847
    %v1976 = vsub.f32 0.0, %v1848
    %v1977 = vsub.f32 0.0, %v1849
    %v1978 = vsub.f32 0.0, %v1850
    %v1979 = vsub.f32 0.0, %v1851
    %v1980 = vsub.f32 0.0, %v1852
    %v1981 = vsub.f32 0.0, %v1853
    %v1982 = vsub.f32 0.0, %v1854
    %v1983 = vsub.f32 0.0, %v1855
    %v1984 = vsub.f32 0.0, %v1856
    %v1985 = vsub.f32 0.0, %v1857
    %v1986 = vsub.f32 0.0, %v1858
    %v1987 = vsub.f32 0.0, %v1859
    %v1988 = vsub.f32 0.0, %v1860
    %v1989 = vsub.f32 0.0, %v1861
    %v1990 = vsub.f32 0.0, %v1862
    %v1991 = vsub.f32 0.0, %v1863
    %v1992 = vsub.f32 0.0, %v1864
    %v1993 = vsub.f32 0.0, %v1865
    %v1994 = vsub.f32 0.0, %v1866
    %v1995 = vsub.f32 0.0, %v1867
    %v1996 = vsub.f32 0.0, %v1868
    %v1997 = vsub.f32 0.0, %v1869
    %v1998 = vsub.f32 0.0, %v1870
    %v1999 = vsub.f32 0.0, %v1871
    %v2000 = vsub.f32 0.0, %v1872
    %v2001 = vsub.f32 0.0, %v1873
    %v2002 = vsub.f32 0.0, %v1874
    %v2003 = vsel %vm1875, %v1939, %v1811
    %v2004 = vsel %vm1876, %v1940, %v1812
    %v2005 = vsel %vm1877, %v1941, %v1813
    %v2006 = vsel %vm1878, %v1942, %v1814
    %v2007 = vsel %vm1879, %v1943, %v1815
    %v2008 = vsel %vm1880, %v1944, %v1816
    %v2009 = vsel %vm1881, %v1945, %v1817
    %v2010 = vsel %vm1882, %v1946, %v1818
    %v2011 = vsel %vm1883, %v1947, %v1819
    %v2012 = vsel %vm1884, %v1948, %v1820
    %v2013 = vsel %vm1885, %v1949, %v1821
    %v2014 = vsel %vm1886, %v1950, %v1822
    %v2015 = vsel %vm1887, %v1951, %v1823
    %v2016 = vsel %vm1888, %v1952, %v1824
    %v2017 = vsel %vm1889, %v1953, %v1825
    %v2018 = vsel %vm1890, %v1954, %v1826
    %v2019 = vsel %vm1891, %v1955, %v1827
    %v2020 = vsel %vm1892, %v1956, %v1828
    %v2021 = vsel %vm1893, %v1957, %v1829
    %v2022 = vsel %vm1894, %v1958, %v1830
    %v2023 = vsel %vm1895, %v1959, %v1831
    %v2024 = vsel %vm1896, %v1960, %v1832
    %v2025 = vsel %vm1897, %v1961, %v1833
    %v2026 = vsel %vm1898, %v1962, %v1834
    %v2027 = vsel %vm1899, %v1963, %v1835
    %v2028 = vsel %vm1900, %v1964, %v1836
    %v2029 = vsel %vm1901, %v1965, %v1837
    %v2030 = vsel %vm1902, %v1966, %v1838
    %v2031 = vsel %vm1903, %v1967, %v1839
    %v2032 = vsel %vm1904, %v1968, %v1840
    %v2033 = vsel %vm1905, %v1969, %v1841
    %v2034 = vsel %vm1906, %v1970, %v1842
    %v2035 = vsel %vm1907, %v1971, %v1843
    %v2036 = vsel %vm1908, %v1972, %v1844
    %v2037 = vsel %vm1909, %v1973, %v1845
    %v2038 = vsel %vm1910, %v1974, %v1846
    %v2039 = vsel %vm1911, %v1975, %v1847
    %v2040 = vsel %vm1912, %v1976, %v1848
    %v2041 = vsel %vm1913, %v1977, %v1849
    %v2042 = vsel %vm1914, %v1978, %v1850
    %v2043 = vsel %vm1915, %v1979, %v1851
    %v2044 = vsel %vm1916, %v1980, %v1852
    %v2045 = vsel %vm1917, %v1981, %v1853
    %v2046 = vsel %vm1918, %v1982, %v1854
    %v2047 = vsel %vm1919, %v1983, %v1855
    %v2048 = vsel %vm1920, %v1984, %v1856
    %v2049 = vsel %vm1921, %v1985, %v1857
    %v2050 = vsel %vm1922, %v1986, %v1858
    %v2051 = vsel %vm1923, %v1987, %v1859
    %v2052 = vsel %vm1924, %v1988, %v1860
    %v2053 = vsel %vm1925, %v1989, %v1861
    %v2054 = vsel %vm1926, %v1990, %v1862
    %v2055 = vsel %vm1927, %v1991, %v1863
    %v2056 = vsel %vm1928, %v1992, %v1864
    %v2057 = vsel %vm1929, %v1993, %v1865
    %v2058 = vsel %vm1930, %v1994, %v1866
    %v2059 = vsel %vm1931, %v1995, %v1867
    %v2060 = vsel %vm1932, %v1996, %v1868
    %v2061 = vsel %vm1933, %v1997, %v1869
    %v2062 = vsel %vm1934, %v1998, %v1870
    %v2063 = vsel %vm1935, %v1999, %v1871
    %v2064 = vsel %vm1936, %v2000, %v1872
    %v2065 = vsel %vm1937, %v2001, %v1873
    %v2066 = vsel %vm1938, %v2002, %v1874
    %v2067 = vadd.f32 %v2003, 1.0
    %v2068 = vadd.f32 %v2004, 1.0
    %v2069 = vadd.f32 %v2005, 1.0
    %v2070 = vadd.f32 %v2006, 1.0
    %v2071 = vadd.f32 %v2007, 1.0
    %v2072 = vadd.f32 %v2008, 1.0
    %v2073 = vadd.f32 %v2009, 1.0
    %v2074 = vadd.f32 %v2010, 1.0
    %v2075 = vadd.f32 %v2011, 1.0
    %v2076 = vadd.f32 %v2012, 1.0
    %v2077 = vadd.f32 %v2013, 1.0
    %v2078 = vadd.f32 %v2014, 1.0
    %v2079 = vadd.f32 %v2015, 1.0
    %v2080 = vadd.f32 %v2016, 1.0
    %v2081 = vadd.f32 %v2017, 1.0
    %v2082 = vadd.f32 %v2018, 1.0
    %v2083 = vadd.f32 %v2019, 1.0
    %v2084 = vadd.f32 %v2020, 1.0
    %v2085 = vadd.f32 %v2021, 1.0
    %v2086 = vadd.f32 %v2022, 1.0
    %v2087 = vadd.f32 %v2023, 1.0
    %v2088 = vadd.f32 %v2024, 1.0
    %v2089 = vadd.f32 %v2025, 1.0
    %v2090 = vadd.f32 %v2026, 1.0
    %v2091 = vadd.f32 %v2027, 1.0
    %v2092 = vadd.f32 %v2028, 1.0
    %v2093 = vadd.f32 %v2029, 1.0
    %v2094 = vadd.f32 %v2030, 1.0
    %v2095 = vadd.f32 %v2031, 1.0
    %v2096 = vadd.f32 %v2032, 1.0
    %v2097 = vadd.f32 %v2033, 1.0
    %v2098 = vadd.f32 %v2034, 1.0
    %v2099 = vadd.f32 %v2035, 1.0
    %v2100 = vadd.f32 %v2036, 1.0
    %v2101 = vadd.f32 %v2037, 1.0
    %v2102 = vadd.f32 %v2038, 1.0
    %v2103 = vadd.f32 %v2039, 1.0
    %v2104 = vadd.f32 %v2040, 1.0
    %v2105 = vadd.f32 %v2041, 1.0
    %v2106 = vadd.f32 %v2042, 1.0
    %v2107 = vadd.f32 %v2043, 1.0
    %v2108 = vadd.f32 %v2044, 1.0
    %v2109 = vadd.f32 %v2045, 1.0
    %v2110 = vadd.f32 %v2046, 1.0
    %v2111 = vadd.f32 %v2047, 1.0
    %v2112 = vadd.f32 %v2048, 1.0
    %v2113 = vadd.f32 %v2049, 1.0
    %v2114 = vadd.f32 %v2050, 1.0
    %v2115 = vadd.f32 %v2051, 1.0
    %v2116 = vadd.f32 %v2052, 1.0
    %v2117 = vadd.f32 %v2053, 1.0
    %v2118 = vadd.f32 %v2054, 1.0
    %v2119 = vadd.f32 %v2055, 1.0
    %v2120 = vadd.f32 %v2056, 1.0
    %v2121 = vadd.f32 %v2057, 1.0
    %v2122 = vadd.f32 %v2058, 1.0
    %v2123 = vadd.f32 %v2059, 1.0
    %v2124 = vadd.f32 %v2060, 1.0
    %v2125 = vadd.f32 %v2061, 1.0
    %v2126 = vadd.f32 %v2062, 1.0
    %v2127 = vadd.f32 %v2063, 1.0
    %v2128 = vadd.f32 %v2064, 1.0
    %v2129 = vadd.f32 %v2065, 1.0
    %v2130 = vadd.f32 %v2066, 1.0
    %v2131 = vmul.f32 %v467, %v2067
    %v2132 = vmul.f32 %v468, %v2068
    %v2133 = vmul.f32 %v469, %v2069
    %v2134 = vmul.f32 %v470, %v2070
    %v2135 = vmul.f32 %v471, %v2071
    %v2136 = vmul.f32 %v472, %v2072
    %v2137 = vmul.f32 %v473, %v2073
    %v2138 = vmul.f32 %v474, %v2074
    %v2139 = vmul.f32 %v475, %v2075
    %v2140 = vmul.f32 %v476, %v2076
    %v2141 = vmul.f32 %v477, %v2077
    %v2142 = vmul.f32 %v478, %v2078
    %v2143 = vmul.f32 %v479, %v2079
    %v2144 = vmul.f32 %v480, %v2080
    %v2145 = vmul.f32 %v481, %v2081
    %v2146 = vmul.f32 %v482, %v2082
    %v2147 = vmul.f32 %v483, %v2083
    %v2148 = vmul.f32 %v484, %v2084
    %v2149 = vmul.f32 %v485, %v2085
    %v2150 = vmul.f32 %v486, %v2086
    %v2151 = vmul.f32 %v487, %v2087
    %v2152 = vmul.f32 %v488, %v2088
    %v2153 = vmul.f32 %v489, %v2089
    %v2154 = vmul.f32 %v490, %v2090
    %v2155 = vmul.f32 %v491, %v2091
    %v2156 = vmul.f32 %v492, %v2092
    %v2157 = vmul.f32 %v493, %v2093
    %v2158 = vmul.f32 %v494, %v2094
    %v2159 = vmul.f32 %v495, %v2095
    %v2160 = vmul.f32 %v496, %v2096
    %v2161 = vmul.f32 %v497, %v2097
    %v2162 = vmul.f32 %v498, %v2098
    %v2163 = vmul.f32 %v499, %v2099
    %v2164 = vmul.f32 %v500, %v2100
    %v2165 = vmul.f32 %v501, %v2101
    %v2166 = vmul.f32 %v502, %v2102
    %v2167 = vmul.f32 %v503, %v2103
    %v2168 = vmul.f32 %v504, %v2104
    %v2169 = vmul.f32 %v505, %v2105
    %v2170 = vmul.f32 %v506, %v2106
    %v2171 = vmul.f32 %v507, %v2107
    %v2172 = vmul.f32 %v508, %v2108
    %v2173 = vmul.f32 %v509, %v2109
    %v2174 = vmul.f32 %v510, %v2110
    %v2175 = vmul.f32 %v511, %v2111
    %v2176 = vmul.f32 %v512, %v2112
    %v2177 = vmul.f32 %v513, %v2113
    %v2178 = vmul.f32 %v514, %v2114
    %v2179 = vmul.f32 %v515, %v2115
    %v2180 = vmul.f32 %v516, %v2116
    %v2181 = vmul.f32 %v517, %v2117
    %v2182 = vmul.f32 %v518, %v2118
    %v2183 = vmul.f32 %v519, %v2119
    %v2184 = vmul.f32 %v520, %v2120
    %v2185 = vmul.f32 %v521, %v2121
    %v2186 = vmul.f32 %v522, %v2122
    %v2187 = vmul.f32 %v523, %v2123
    %v2188 = vmul.f32 %v524, %v2124
    %v2189 = vmul.f32 %v525, %v2125
    %v2190 = vmul.f32 %v526, %v2126
    %v2191 = vmul.f32 %v527, %v2127
    %v2192 = vmul.f32 %v528, %v2128
    %v2193 = vmul.f32 %v529, %v2129
    %v2194 = vmul.f32 %v530, %v2130
    %2195 = vst [vmem:[#allocation7] sm:$0xff] %v2131
    %2196 = vst [vmem:[#allocation7 + $0x8] sm:$0xff] %v2132
    %2197 = vst [vmem:[#allocation7 + $0x10] sm:$0xff] %v2133
    %2198 = vst [vmem:[#allocation7 + $0x18] sm:$0xff] %v2134
    %2199 = vst [vmem:[#allocation7 + $0x20] sm:$0xff] %v2135
    %2200 = vst [vmem:[#allocation7 + $0x28] sm:$0xff] %v2136
    %2201 = vst [vmem:[#allocation7 + $0x30] sm:$0xff] %v2137
    %2202 = vst [vmem:[#allocation7 + $0x38] sm:$0xff] %v2138
    %2203 = vst [vmem:[#allocation7 + $0x40] sm:$0xff] %v2139
    %2204 = vst [vmem:[#allocation7 + $0x48] sm:$0xff] %v2140
    %2205 = vst [vmem:[#allocation7 + $0x50] sm:$0xff] %v2141
    %2206 = vst [vmem:[#allocation7 + $0x58] sm:$0xff] %v2142
    %2207 = vst [vmem:[#allocation7 + $0x60] sm:$0xff] %v2143
    %2208 = vst [vmem:[#allocation7 + $0x68] sm:$0xff] %v2144
    %2209 = vst [vmem:[#allocation7 + $0x70] sm:$0xff] %v2145
    %2210 = vst [vmem:[#allocation7 + $0x78] sm:$0xff] %v2146
    %2211 = vst [vmem:[#allocation7 + $0x80] sm:$0xff] %v2147
    %2212 = vst [vmem:[#allocation7 + $0x88] sm:$0xff] %v2148
    %2213 = vst [vmem:[#allocation7 + $0x90] sm:$0xff] %v2149
    %2214 = vst [vmem:[#allocation7 + $0x98] sm:$0xff] %v2150
    %2215 = vst [vmem:[#allocation7 + $0xa0] sm:$0xff] %v2151
    %2216 = vst [vmem:[#allocation7 + $0xa8] sm:$0xff] %v2152
    %2217 = vst [vmem:[#allocation7 + $0xb0] sm:$0xff] %v2153
    %2218 = vst [vmem:[#allocation7 + $0xb8] sm:$0xff] %v2154
    %2219 = vst [vmem:[#allocation7 + $0xc0] sm:$0xff] %v2155
    %2220 = vst [vmem:[#allocation7 + $0xc8] sm:$0xff] %v2156
    %2221 = vst [vmem:[#allocation7 + $0xd0] sm:$0xff] %v2157
    %2222 = vst [vmem:[#allocation7 + $0xd8] sm:$0xff] %v2158
    %2223 = vst [vmem:[#allocation7 + $0xe0] sm:$0xff] %v2159
    %2224 = vst [vmem:[#allocation7 + $0xe8] sm:$0xff] %v2160
    %2225 = vst [vmem:[#allocation7 + $0xf0] sm:$0xff] %v2161
    %2226 = vst [vmem:[#allocation7 + $0xf8] sm:$0xff] %v2162
    %2227 = vst [vmem:[#allocation7 + $0x100] sm:$0xff] %v2163
    %2228 = vst [vmem:[#allocation7 + $0x108] sm:$0xff] %v2164
    %2229 = vst [vmem:[#allocation7 + $0x110] sm:$0xff] %v2165
    %2230 = vst [vmem:[#allocation7 + $0x118] sm:$0xff] %v2166
    %2231 = vst [vmem:[#allocation7 + $0x120] sm:$0xff] %v2167
    %2232 = vst [vmem:[#allocation7 + $0x128] sm:$0xff] %v2168
    %2233 = vst [vmem:[#allocation7 + $0x130] sm:$0xff] %v2169
    %2234 = vst [vmem:[#allocation7 + $0x138] sm:$0xff] %v2170
    %2235 = vst [vmem:[#allocation7 + $0x140] sm:$0xff] %v2171
    %2236 = vst [vmem:[#allocation7 + $0x148] sm:$0xff] %v2172
    %2237 = vst [vmem:[#allocation7 + $0x150] sm:$0xff] %v2173
    %2238 = vst [vmem:[#allocation7 + $0x158] sm:$0xff] %v2174
    %2239 = vst [vmem:[#allocation7 + $0x160] sm:$0xff] %v2175
    %2240 = vst [vmem:[#allocation7 + $0x168] sm:$0xff] %v2176
    %2241 = vst [vmem:[#allocation7 + $0x170] sm:$0xff] %v2177
    %2242 = vst [vmem:[#allocation7 + $0x178] sm:$0xff] %v2178
    %2243 = vst [vmem:[#allocation7 + $0x180] sm:$0xff] %v2179
    %2244 = vst [vmem:[#allocation7 + $0x188] sm:$0xff] %v2180
    %2245 = vst [vmem:[#allocation7 + $0x190] sm:$0xff] %v2181
    %2246 = vst [vmem:[#allocation7 + $0x198] sm:$0xff] %v2182
    %2247 = vst [vmem:[#allocation7 + $0x1a0] sm:$0xff] %v2183
    %2248 = vst [vmem:[#allocation7 + $0x1a8] sm:$0xff] %v2184
    %2249 = vst [vmem:[#allocation7 + $0x1b0] sm:$0xff] %v2185
    %2250 = vst [vmem:[#allocation7 + $0x1b8] sm:$0xff] %v2186
    %2251 = vst [vmem:[#allocation7 + $0x1c0] sm:$0xff] %v2187
    %2252 = vst [vmem:[#allocation7 + $0x1c8] sm:$0xff] %v2188
    %2253 = vst [vmem:[#allocation7 + $0x1d0] sm:$0xff] %v2189
    %2254 = vst [vmem:[#allocation7 + $0x1d8] sm:$0xff] %v2190
    %2255 = vst [vmem:[#allocation7 + $0x1e0] sm:$0xff] %v2191
    %2256 = vst [vmem:[#allocation7 + $0x1e8] sm:$0xff] %v2192
    %2257 = vst [vmem:[#allocation7 + $0x1f0] sm:$0xff] %v2193
    %2258 = vst [vmem:[#allocation7 + $0x1f8] sm:$0xff] %v2194
    // Predicated region
    $region22: #{tpu_custom_call.1} parent=1 // pred_check
      _
    $region23: #{tpu_custom_call.1} parent=1 // pred_check_branch
      %2260 = sbr.rel (0) target = $region25
    $region24: #{tpu_custom_call.1} parent=1 // pred_region
      %s2262 = ssub.s32 8192, 8192
      %2263 = vsyncadd [#allocation4], %s2262
      %s2264 = sshll.u32 [#allocation7], 4
      %s2265 = int_to_ptr.vmem [resolvable:$true] %s2264
      %2270 = dma.vmem_to_hbm [thread:$0]  %s2265, 8192, %s3, [#allocation4], 512, 512, 32
    $region25: #{tpu_custom_call.1} parent=1 // pred_fallthru
      _
    // Predicated region
    $region26: #{tpu_custom_call.1} parent=1 // pred_check
      _
    $region27: #{tpu_custom_call.1} parent=1 // pred_check_branch
      %2272 = sbr.rel (0) target = $region29
    $region28: #{tpu_custom_call.1} parent=1 // pred_region
      %2273 = dma.done [#allocation4], 8192
    $region29: #{tpu_custom_call.1} parent=1 // pred_fallthru
      _
    %2274 = vsyncpa [#allocation3], 1
    %2275 = vsyncpa [#allocation6], 1
    %2276 = vsyncpa [#allocation4], 1

</llo_original>
